<compile_context>
chip_gen: v7x
topology: tpu7x:2x2x1
jax: 0.10.0
libtpu: 0.0.40
codegen_flags: <defaults>
</compile_context>

<pallas_src>
import functools

import jax
import jax.numpy as jnp
from jax import lax
from jax.experimental import pallas as pl
from jax.experimental.pallas import tpu as pltpu


_TAPS = tuple((dh, dw) for dh in range(3) for dw in range(3))


def _lane_masks(H, W):
    """Validity mask (1, H*W) bool per 3x3 tap on the flattened lane axis.

    None means the tap is valid everywhere (center row / center column)."""
    HW = H * W
    lane = lax.broadcasted_iota(jnp.int32, (1, HW), 1)
    col = lane % W
    masks = {}
    for dh, dw in _TAPS:
        conds = []
        if dh == 0:
            conds.append(lane >= W)              # source row r-1 must exist
        elif dh == 2:
            conds.append(lane < (H - 1) * W)     # source row r+1 must exist
        if dw == 0:
            conds.append(col >= 1)               # source col c-1 must exist
        elif dw == 2:
            conds.append(col < W - 1)            # source col c+1 must exist
        m = None
        for c in conds:
            m = c if m is None else jnp.logical_and(m, c)
        masks[(dh, dw)] = m
    return masks


def _conv3x3(inp, w_taps_ref, bias_ref, masks, H, W):
    """3x3 SAME conv as 9 accumulated MXU matmuls on a lane-dense slab.

    inp        : (Cin, H*W) f32
    w_taps_ref : Ref (9, Cout, Cin)   tap-major (dh*3 + dw)
    bias_ref   : Ref (Cout, 1)
    returns      (Cout, H*W) f32
    """
    HW = H * W
    acc = None
    for t, (dh, dw) in enumerate(_TAPS):
        # tap(r, c) = inp(r + dh - 1, c + dw - 1); jnp.roll semantics:
        # out[j] = in[j - shift]  =>  shift = (1 - dh) * W + (1 - dw).
        shift = ((1 - dh) * W + (1 - dw)) % HW
        tap = inp if shift == 0 else pltpu.roll(inp, shift=shift, axis=1)
        m = masks[(dh, dw)]
        if m is not None:
            tap = jnp.where(m, tap, 0.0)         # zero-padding at image border
        part = jnp.dot(w_taps_ref[t], tap, preferred_element_type=jnp.float32)
        acc = part if acc is None else acc + part
    return acc + bias_ref[...]                    # (Cout,1) broadcast along lanes


def sam_kernel(x_ref, ximg_ref, w12_ref, b12_ref, w3_ref, b3_ref,
               x1_ref, img_ref, *, H, W):
    # x_ref   : (C, HW)          ximg_ref : (3, HW)
    # w12_ref : (9, C+3, C)      b12_ref  : (C+3, 1)
    # w3_ref  : (9, C, 3)        b3_ref   : (C, 1)
    # x1_ref  : (C, HW)          img_ref  : (3, HW)
    C = x_ref.shape[0]
    x = x_ref[...]                                # (C, HW) lane-dense

    masks = _lane_masks(H, W)                     # shared by both convs

    # fused conv1 || conv2 : Cout = C + 3, shared taps of x
    y12 = _conv3x3(x, w12_ref, b12_ref, masks, H, W)   # (C+3, HW)

    img = y12[C:, :] + ximg_ref[...]              # conv2(x) + x_img
    img_ref[...] = img

    # conv3 on img, then sigmoid gate
    x2 = jax.nn.sigmoid(_conv3x3(img, w3_ref, b3_ref, masks, H, W))

    # x1 = conv1(x) * x2 + x (residual), lane-dense store
    x1_ref[...] = y12[:C, :] * x2 + x


def sam_forward(x_nchw, x_img_nchw, params):
    """Pallas SAM forward. Inputs/outputs are NCHW (PyTorch convention).

    params = (w1, b1, w2, b2, w3, b3) with HWIO conv weights (3,3,Cin,Cout)
    and 1-D biases (Cout,).
    """
    w1, b1, w2, b2, w3, b3 = params
    N, C, H, W = x_nchw.shape
    HW = H * W

    # free reshapes: NCHW -> (N, C, H*W); no transpose, no HBM pad round-trip
    x = x_nchw.reshape(N, C, HW).astype(jnp.float32)
    ximg = x_img_nchw.reshape(N, 3, HW).astype(jnp.float32)

    def taps(w_hwio):
        # (3,3,Cin,Cout) -> (9, Cout, Cin), tap-major, matching _TAPS order.
        kh, kw, cin, cout = w_hwio.shape
        return jnp.transpose(w_hwio, (0, 1, 3, 2)).reshape(
            kh * kw, cout, cin).astype(jnp.float32)

    w12_taps = jnp.concatenate([taps(w1), taps(w2)], axis=1)      # (9, C+3, C)
    b12 = jnp.concatenate(
        [b1.reshape(-1), b2.reshape(-1)]).reshape(-1, 1).astype(jnp.float32)
    w3_taps = taps(w3)                                            # (9, C, 3)
    b3c = b3.reshape(-1, 1).astype(jnp.float32)

    kernel = functools.partial(sam_kernel, H=H, W=W)

    x1_flat, img_flat = pl.pallas_call(
        kernel,
        out_shape=(jax.ShapeDtypeStruct((N, C, HW), jnp.float32),
                   jax.ShapeDtypeStruct((N, 3, HW), jnp.float32)),
        grid_spec=pltpu.PrefetchScalarGridSpec(
            num_scalar_prefetch=0,
            grid=(N,),
            in_specs=[
                pl.BlockSpec((None, C, HW), lambda b: (b, 0, 0)),     # x
                pl.BlockSpec((None, 3, HW), lambda b: (b, 0, 0)),     # x_img
                pl.BlockSpec((9, C + 3, C), lambda b: (0, 0, 0)),     # w12 taps
                pl.BlockSpec((C + 3, 1), lambda b: (0, 0)),           # b12
                pl.BlockSpec((9, C, 3), lambda b: (0, 0, 0)),         # w3 taps
                pl.BlockSpec((C, 1), lambda b: (0, 0)),               # b3
            ],
            out_specs=[
                pl.BlockSpec((None, C, HW), lambda b: (b, 0, 0)),     # x1
                pl.BlockSpec((None, 3, HW), lambda b: (b, 0, 0)),     # img
            ],
        ),
        compiler_params=pltpu.CompilerParams(
            dimension_semantics=("parallel",)),
    )(x, ximg, w12_taps, b12, w3_taps, b3c)

    return (x1_flat.reshape(N, C, H, W), img_flat.reshape(N, 3, H, W))


# ---------------- plain-JAX reference (for correctness check) ----------------
def _ref_conv(x_nhwc, w_hwio, b):
    y = lax.conv_general_dilated(
        x_nhwc, w_hwio, window_strides=(1, 1), padding="SAME",
        dimension_numbers=("NHWC", "HWIO", "NHWC"))
    return y + b.reshape(1, 1, 1, -1)


def sam_reference(x_nchw, x_img_nchw, params):
    w1, b1, w2, b2, w3, b3 = params
    x = jnp.transpose(x_nchw, (0, 2, 3, 1)).astype(jnp.float32)
    ximg = jnp.transpose(x_img_nchw, (0, 2, 3, 1)).astype(jnp.float32)
    x1 = _ref_conv(x, w1, b1)
    img = _ref_conv(x, w2, b2) + ximg
    x2 = jax.nn.sigmoid(_ref_conv(img, w3, b3))
    x1 = x1 * x2 + x
    return (jnp.transpose(x1, (0, 3, 1, 2)),
            jnp.transpose(img, (0, 3, 1, 2)))


if __name__ == "__main__":
    N, n_feat, Hdim, Wdim = 2, 8, 16, 16

    key = jax.random.PRNGKey(0)
    k_x, k_img, k1, k2, k3, k4, k5, k6 = jax.random.split(key, 8)

    # PyTorch NCHW inputs
    x = jax.random.normal(k_x, (N, n_feat, Hdim, Wdim), jnp.float32)
    x_img = jax.random.normal(k_img, (N, 3, Hdim, Wdim), jnp.float32)

    # deterministic synthetic weights (HWIO) and 1-D biases
    w1 = 0.1 * jax.random.normal(k1, (3, 3, n_feat, n_feat), jnp.float32)
    b1 = 0.1 * jax.random.normal(k2, (n_feat,), jnp.float32)
    w2 = 0.1 * jax.random.normal(k3, (3, 3, n_feat, 3), jnp.float32)
    b2 = 0.1 * jax.random.normal(k4, (3,), jnp.float32)
    w3 = 0.1 * jax.random.normal(k5, (3, 3, 3, n_feat), jnp.float32)
    b3 = 0.1 * jax.random.normal(k6, (n_feat,), jnp.float32)
    params = (w1, b1, w2, b2, w3, b3)

    x1_out, img_out = sam_forward(x, x_img, params)
    jax.block_until_ready((x1_out, img_out))

    x1_ref, img_ref = sam_reference(x, x_img, params)
    assert x1_out.shape == (N, n_feat, Hdim, Wdim)
    assert img_out.shape == (N, 3, Hdim, Wdim)
    assert jnp.allclose(x1_out, x1_ref, atol=1e-4, rtol=1e-4)
    assert jnp.allclose(img_out, img_ref, atol=1e-4, rtol=1e-4)

    print("KERNEL_OK")
</pallas_src>

<mosaic_0001>
module attributes {stable_mosaic.version = 11 : i64} {
  func.func @sam_kernel(%arg0: i32, %arg1: memref<1x8x256xf32, #tpu.memory_space<vmem>>, %arg2: memref<1x3x256xf32, #tpu.memory_space<vmem>>, %arg3: memref<9x11x8xf32, #tpu.memory_space<vmem>>, %arg4: memref<11x1xf32, #tpu.memory_space<vmem>>, %arg5: memref<9x8x3xf32, #tpu.memory_space<vmem>>, %arg6: memref<8x1xf32, #tpu.memory_space<vmem>>, %arg7: memref<1x8x256xf32, #tpu.memory_space<vmem>>, %arg8: memref<1x3x256xf32, #tpu.memory_space<vmem>>) attributes {dimension_semantics = [#tpu.dimension_semantics<parallel>], iteration_bounds = array<i64: 2>, scalar_prefetch = 0 : i64, scratch_operands = 0 : i64, tpu.core_type = #tpu.core_type<tc>, window_params = [{transform_indices = @transform_0, window_bounds = array<i64: 1, 8, 256>}, {transform_indices = @transform_1, window_bounds = array<i64: 1, 3, 256>}, {pipeline_mode = #tpu.pipeline_mode<synchronous>, transform_indices = @transform_2, window_bounds = array<i64: 9, 11, 8>}, {pipeline_mode = #tpu.pipeline_mode<synchronous>, transform_indices = @transform_3, window_bounds = array<i64: 11, 1>}, {pipeline_mode = #tpu.pipeline_mode<synchronous>, transform_indices = @transform_4, window_bounds = array<i64: 9, 8, 3>}, {pipeline_mode = #tpu.pipeline_mode<synchronous>, transform_indices = @transform_5, window_bounds = array<i64: 8, 1>}, {transform_indices = @transform_6, window_bounds = array<i64: 1, 8, 256>}, {transform_indices = @transform_7, window_bounds = array<i64: 1, 3, 256>}]} {
    %c0 = arith.constant 0 : index
    %c0_0 = arith.constant 0 : index
    %c0_1 = arith.constant 0 : index
    %0 = vector.load %arg1[%c0, %c0_0, %c0_1] : memref<1x8x256xf32, #tpu.memory_space<vmem>>, vector<1x8x256xf32>
    %1 = vector.shape_cast %0 : vector<1x8x256xf32> to vector<8x256xf32>
    %2 = tpu.iota {dimensions = array<i32: 1>} : vector<1x256xi32>
    %c16_i32 = arith.constant 16 : i32
    %c0_i32 = arith.constant 0 : i32
    %3 = arith.cmpi eq, %c16_i32, %c0_i32 : i32
    %c1_i32 = arith.constant 1 : i32
    %4 = arith.select %3, %c1_i32, %c16_i32 : i32
    %5 = vector.broadcast %4 : i32 to vector<1x256xi32>
    %6 = arith.remsi %2, %5 : vector<1x256xi32>
    %c0_i32_2 = arith.constant 0 : i32
    %7 = vector.broadcast %c0_i32_2 : i32 to vector<1x256xi32>
    %8 = arith.cmpi ne, %6, %7 : vector<1x256xi32>
    %c0_i32_3 = arith.constant 0 : i32
    %9 = vector.broadcast %c0_i32_3 : i32 to vector<1x256xi32>
    %10 = arith.cmpi slt, %6, %9 : vector<1x256xi32>
    %c0_i32_4 = arith.constant 0 : i32
    %11 = arith.cmpi slt, %4, %c0_i32_4 : i32
    %12 = vector.broadcast %11 : i1 to vector<1x256xi1>
    %13 = vector.broadcast %12 : vector<1x256xi1> to vector<1x256xi1>
    %14 = arith.xori %10, %13 : vector<1x256xi1>
    %15 = arith.andi %14, %8 : vector<1x256xi1>
    %16 = vector.broadcast %4 : i32 to vector<1x256xi32>
    %17 = arith.addi %6, %16 : vector<1x256xi32>
    %18 = arith.select %15, %17, %6 : vector<1x256xi1>, vector<1x256xi32>
    %c16_i32_5 = arith.constant 16 : i32
    %19 = vector.broadcast %c16_i32_5 : i32 to vector<1x256xi32>
    %20 = arith.cmpi sge, %2, %19 : vector<1x256xi32>
    %c1_i32_6 = arith.constant 1 : i32
    %21 = vector.broadcast %c1_i32_6 : i32 to vector<1x256xi32>
    %22 = arith.cmpi sge, %18, %21 : vector<1x256xi32>
    %23 = arith.andi %20, %22 : vector<1x256xi1>
    %c16_i32_7 = arith.constant 16 : i32
    %24 = vector.broadcast %c16_i32_7 : i32 to vector<1x256xi32>
    %25 = arith.cmpi sge, %2, %24 : vector<1x256xi32>
    %c16_i32_8 = arith.constant 16 : i32
    %26 = vector.broadcast %c16_i32_8 : i32 to vector<1x256xi32>
    %27 = arith.cmpi sge, %2, %26 : vector<1x256xi32>
    %c15_i32 = arith.constant 15 : i32
    %28 = vector.broadcast %c15_i32 : i32 to vector<1x256xi32>
    %29 = arith.cmpi slt, %18, %28 : vector<1x256xi32>
    %30 = arith.andi %27, %29 : vector<1x256xi1>
    %c1_i32_9 = arith.constant 1 : i32
    %31 = vector.broadcast %c1_i32_9 : i32 to vector<1x256xi32>
    %32 = arith.cmpi sge, %18, %31 : vector<1x256xi32>
    %c15_i32_10 = arith.constant 15 : i32
    %33 = vector.broadcast %c15_i32_10 : i32 to vector<1x256xi32>
    %34 = arith.cmpi slt, %18, %33 : vector<1x256xi32>
    %c240_i32 = arith.constant 240 : i32
    %35 = vector.broadcast %c240_i32 : i32 to vector<1x256xi32>
    %36 = arith.cmpi slt, %2, %35 : vector<1x256xi32>
    %c1_i32_11 = arith.constant 1 : i32
    %37 = vector.broadcast %c1_i32_11 : i32 to vector<1x256xi32>
    %38 = arith.cmpi sge, %18, %37 : vector<1x256xi32>
    %39 = arith.andi %36, %38 : vector<1x256xi1>
    %c240_i32_12 = arith.constant 240 : i32
    %40 = vector.broadcast %c240_i32_12 : i32 to vector<1x256xi32>
    %41 = arith.cmpi slt, %2, %40 : vector<1x256xi32>
    %c240_i32_13 = arith.constant 240 : i32
    %42 = vector.broadcast %c240_i32_13 : i32 to vector<1x256xi32>
    %43 = arith.cmpi slt, %2, %42 : vector<1x256xi32>
    %c15_i32_14 = arith.constant 15 : i32
    %44 = vector.broadcast %c15_i32_14 : i32 to vector<1x256xi32>
    %45 = arith.cmpi slt, %18, %44 : vector<1x256xi32>
    %46 = arith.andi %43, %45 : vector<1x256xi1>
    %c17_i32 = arith.constant 17 : i32
    %47 = tpu.dynamic_rotate %1 by %c17_i32 dim 1 : vector<8x256xf32>, i32 -> vector<8x256xf32>
    %cst = arith.constant 0.000000e+00 : f32
    %48 = vector.shape_cast %23 : vector<1x256xi1> to vector<1x256xi1>
    %49 = vector.broadcast %48 : vector<1x256xi1> to vector<8x256xi1>
    %50 = vector.broadcast %cst : f32 to vector<8x256xf32>
    %51 = arith.select %49, %47, %50 : vector<8x256xi1>, vector<8x256xf32>
    %c0_15 = arith.constant 0 : index
    %c0_16 = arith.constant 0 : index
    %c0_17 = arith.constant 0 : index
    %52 = vector.load %arg3[%c0_15, %c0_16, %c0_17] : memref<9x11x8xf32, #tpu.memory_space<vmem>>, vector<1x11x8xf32>
    %53 = vector.shape_cast %52 : vector<1x11x8xf32> to vector<11x8xf32>
    %cst_18 = arith.constant dense<0.000000e+00> : vector<11x256xf32>
    %54 = tpu.matmul %53, %51, %cst_18 {dimension_numbers = #tpu.dot_dimension_numbers<[1], [0], [0], [1], [0, 0, 1, 1], [], []>} : vector<11x8xf32>, vector<8x256xf32>, vector<11x256xf32> -> vector<11x256xf32>
    %c16_i32_19 = arith.constant 16 : i32
    %55 = tpu.dynamic_rotate %1 by %c16_i32_19 dim 1 : vector<8x256xf32>, i32 -> vector<8x256xf32>
    %cst_20 = arith.constant 0.000000e+00 : f32
    %56 = vector.shape_cast %25 : vector<1x256xi1> to vector<1x256xi1>
    %57 = vector.broadcast %56 : vector<1x256xi1> to vector<8x256xi1>
    %58 = vector.broadcast %cst_20 : f32 to vector<8x256xf32>
    %59 = arith.select %57, %55, %58 : vector<8x256xi1>, vector<8x256xf32>
    %c1 = arith.constant 1 : index
    %c0_21 = arith.constant 0 : index
    %c0_22 = arith.constant 0 : index
    %60 = vector.load %arg3[%c1, %c0_21, %c0_22] : memref<9x11x8xf32, #tpu.memory_space<vmem>>, vector<1x11x8xf32>
    %61 = vector.shape_cast %60 : vector<1x11x8xf32> to vector<11x8xf32>
    %cst_23 = arith.constant dense<0.000000e+00> : vector<11x256xf32>
    %62 = tpu.matmul %61, %59, %cst_23 {dimension_numbers = #tpu.dot_dimension_numbers<[1], [0], [0], [1], [0, 0, 1, 1], [], []>} : vector<11x8xf32>, vector<8x256xf32>, vector<11x256xf32> -> vector<11x256xf32>
    %63 = arith.addf %54, %62 : vector<11x256xf32>
    %c15_i32_24 = arith.constant 15 : i32
    %64 = tpu.dynamic_rotate %1 by %c15_i32_24 dim 1 : vector<8x256xf32>, i32 -> vector<8x256xf32>
    %cst_25 = arith.constant 0.000000e+00 : f32
    %65 = vector.shape_cast %30 : vector<1x256xi1> to vector<1x256xi1>
    %66 = vector.broadcast %65 : vector<1x256xi1> to vector<8x256xi1>
    %67 = vector.broadcast %cst_25 : f32 to vector<8x256xf32>
    %68 = arith.select %66, %64, %67 : vector<8x256xi1>, vector<8x256xf32>
    %c2 = arith.constant 2 : index
    %c0_26 = arith.constant 0 : index
    %c0_27 = arith.constant 0 : index
    %69 = vector.load %arg3[%c2, %c0_26, %c0_27] : memref<9x11x8xf32, #tpu.memory_space<vmem>>, vector<1x11x8xf32>
    %70 = vector.shape_cast %69 : vector<1x11x8xf32> to vector<11x8xf32>
    %cst_28 = arith.constant dense<0.000000e+00> : vector<11x256xf32>
    %71 = tpu.matmul %70, %68, %cst_28 {dimension_numbers = #tpu.dot_dimension_numbers<[1], [0], [0], [1], [0, 0, 1, 1], [], []>} : vector<11x8xf32>, vector<8x256xf32>, vector<11x256xf32> -> vector<11x256xf32>
    %72 = arith.addf %63, %71 : vector<11x256xf32>
    %c1_i32_29 = arith.constant 1 : i32
    %73 = tpu.dynamic_rotate %1 by %c1_i32_29 dim 1 : vector<8x256xf32>, i32 -> vector<8x256xf32>
    %cst_30 = arith.constant 0.000000e+00 : f32
    %74 = vector.shape_cast %32 : vector<1x256xi1> to vector<1x256xi1>
    %75 = vector.broadcast %74 : vector<1x256xi1> to vector<8x256xi1>
    %76 = vector.broadcast %cst_30 : f32 to vector<8x256xf32>
    %77 = arith.select %75, %73, %76 : vector<8x256xi1>, vector<8x256xf32>
    %c3 = arith.constant 3 : index
    %c0_31 = arith.constant 0 : index
    %c0_32 = arith.constant 0 : index
    %78 = vector.load %arg3[%c3, %c0_31, %c0_32] : memref<9x11x8xf32, #tpu.memory_space<vmem>>, vector<1x11x8xf32>
    %79 = vector.shape_cast %78 : vector<1x11x8xf32> to vector<11x8xf32>
    %cst_33 = arith.constant dense<0.000000e+00> : vector<11x256xf32>
    %80 = tpu.matmul %79, %77, %cst_33 {dimension_numbers = #tpu.dot_dimension_numbers<[1], [0], [0], [1], [0, 0, 1, 1], [], []>} : vector<11x8xf32>, vector<8x256xf32>, vector<11x256xf32> -> vector<11x256xf32>
    %81 = arith.addf %72, %80 : vector<11x256xf32>
    %c4 = arith.constant 4 : index
    %c0_34 = arith.constant 0 : index
    %c0_35 = arith.constant 0 : index
    %82 = vector.load %arg3[%c4, %c0_34, %c0_35] : memref<9x11x8xf32, #tpu.memory_space<vmem>>, vector<1x11x8xf32>
    %83 = vector.shape_cast %82 : vector<1x11x8xf32> to vector<11x8xf32>
    %cst_36 = arith.constant dense<0.000000e+00> : vector<11x256xf32>
    %84 = tpu.matmul %83, %1, %cst_36 {dimension_numbers = #tpu.dot_dimension_numbers<[1], [0], [0], [1], [0, 0, 1, 1], [], []>} : vector<11x8xf32>, vector<8x256xf32>, vector<11x256xf32> -> vector<11x256xf32>
    %85 = arith.addf %81, %84 : vector<11x256xf32>
    %c255_i32 = arith.constant 255 : i32
    %86 = tpu.dynamic_rotate %1 by %c255_i32 dim 1 : vector<8x256xf32>, i32 -> vector<8x256xf32>
    %cst_37 = arith.constant 0.000000e+00 : f32
    %87 = vector.shape_cast %34 : vector<1x256xi1> to vector<1x256xi1>
    %88 = vector.broadcast %87 : vector<1x256xi1> to vector<8x256xi1>
    %89 = vector.broadcast %cst_37 : f32 to vector<8x256xf32>
    %90 = arith.select %88, %86, %89 : vector<8x256xi1>, vector<8x256xf32>
    %c5 = arith.constant 5 : index
    %c0_38 = arith.constant 0 : index
    %c0_39 = arith.constant 0 : index
    %91 = vector.load %arg3[%c5, %c0_38, %c0_39] : memref<9x11x8xf32, #tpu.memory_space<vmem>>, vector<1x11x8xf32>
    %92 = vector.shape_cast %91 : vector<1x11x8xf32> to vector<11x8xf32>
    %cst_40 = arith.constant dense<0.000000e+00> : vector<11x256xf32>
    %93 = tpu.matmul %92, %90, %cst_40 {dimension_numbers = #tpu.dot_dimension_numbers<[1], [0], [0], [1], [0, 0, 1, 1], [], []>} : vector<11x8xf32>, vector<8x256xf32>, vector<11x256xf32> -> vector<11x256xf32>
    %94 = arith.addf %85, %93 : vector<11x256xf32>
    %c241_i32 = arith.constant 241 : i32
    %95 = tpu.dynamic_rotate %1 by %c241_i32 dim 1 : vector<8x256xf32>, i32 -> vector<8x256xf32>
    %cst_41 = arith.constant 0.000000e+00 : f32
    %96 = vector.shape_cast %39 : vector<1x256xi1> to vector<1x256xi1>
    %97 = vector.broadcast %96 : vector<1x256xi1> to vector<8x256xi1>
    %98 = vector.broadcast %cst_41 : f32 to vector<8x256xf32>
    %99 = arith.select %97, %95, %98 : vector<8x256xi1>, vector<8x256xf32>
    %c6 = arith.constant 6 : index
    %c0_42 = arith.constant 0 : index
    %c0_43 = arith.constant 0 : index
    %100 = vector.load %arg3[%c6, %c0_42, %c0_43] : memref<9x11x8xf32, #tpu.memory_space<vmem>>, vector<1x11x8xf32>
    %101 = vector.shape_cast %100 : vector<1x11x8xf32> to vector<11x8xf32>
    %cst_44 = arith.constant dense<0.000000e+00> : vector<11x256xf32>
    %102 = tpu.matmul %101, %99, %cst_44 {dimension_numbers = #tpu.dot_dimension_numbers<[1], [0], [0], [1], [0, 0, 1, 1], [], []>} : vector<11x8xf32>, vector<8x256xf32>, vector<11x256xf32> -> vector<11x256xf32>
    %103 = arith.addf %94, %102 : vector<11x256xf32>
    %c240_i32_45 = arith.constant 240 : i32
    %104 = tpu.dynamic_rotate %1 by %c240_i32_45 dim 1 : vector<8x256xf32>, i32 -> vector<8x256xf32>
    %cst_46 = arith.constant 0.000000e+00 : f32
    %105 = vector.shape_cast %41 : vector<1x256xi1> to vector<1x256xi1>
    %106 = vector.broadcast %105 : vector<1x256xi1> to vector<8x256xi1>
    %107 = vector.broadcast %cst_46 : f32 to vector<8x256xf32>
    %108 = arith.select %106, %104, %107 : vector<8x256xi1>, vector<8x256xf32>
    %c7 = arith.constant 7 : index
    %c0_47 = arith.constant 0 : index
    %c0_48 = arith.constant 0 : index
    %109 = vector.load %arg3[%c7, %c0_47, %c0_48] : memref<9x11x8xf32, #tpu.memory_space<vmem>>, vector<1x11x8xf32>
    %110 = vector.shape_cast %109 : vector<1x11x8xf32> to vector<11x8xf32>
    %cst_49 = arith.constant dense<0.000000e+00> : vector<11x256xf32>
    %111 = tpu.matmul %110, %108, %cst_49 {dimension_numbers = #tpu.dot_dimension_numbers<[1], [0], [0], [1], [0, 0, 1, 1], [], []>} : vector<11x8xf32>, vector<8x256xf32>, vector<11x256xf32> -> vector<11x256xf32>
    %112 = arith.addf %103, %111 : vector<11x256xf32>
    %c239_i32 = arith.constant 239 : i32
    %113 = tpu.dynamic_rotate %1 by %c239_i32 dim 1 : vector<8x256xf32>, i32 -> vector<8x256xf32>
    %cst_50 = arith.constant 0.000000e+00 : f32
    %114 = vector.shape_cast %46 : vector<1x256xi1> to vector<1x256xi1>
    %115 = vector.broadcast %114 : vector<1x256xi1> to vector<8x256xi1>
    %116 = vector.broadcast %cst_50 : f32 to vector<8x256xf32>
    %117 = arith.select %115, %113, %116 : vector<8x256xi1>, vector<8x256xf32>
    %c8 = arith.constant 8 : index
    %c0_51 = arith.constant 0 : index
    %c0_52 = arith.constant 0 : index
    %118 = vector.load %arg3[%c8, %c0_51, %c0_52] : memref<9x11x8xf32, #tpu.memory_space<vmem>>, vector<1x11x8xf32>
    %119 = vector.shape_cast %118 : vector<1x11x8xf32> to vector<11x8xf32>
    %cst_53 = arith.constant dense<0.000000e+00> : vector<11x256xf32>
    %120 = tpu.matmul %119, %117, %cst_53 {dimension_numbers = #tpu.dot_dimension_numbers<[1], [0], [0], [1], [0, 0, 1, 1], [], []>} : vector<11x8xf32>, vector<8x256xf32>, vector<11x256xf32> -> vector<11x256xf32>
    %121 = arith.addf %112, %120 : vector<11x256xf32>
    %c0_54 = arith.constant 0 : index
    %c0_55 = arith.constant 0 : index
    %122 = vector.load %arg4[%c0_54, %c0_55] : memref<11x1xf32, #tpu.memory_space<vmem>>, vector<11x1xf32>
    %123 = vector.broadcast %122 : vector<11x1xf32> to vector<11x256xf32>
    %124 = arith.addf %121, %123 : vector<11x256xf32>
    %125 = vector.extract_strided_slice %124 {offsets = [8, 0], sizes = [3, 256], strides = [1, 1]} : vector<11x256xf32> to vector<3x256xf32>
    %c0_56 = arith.constant 0 : index
    %c0_57 = arith.constant 0 : index
    %c0_58 = arith.constant 0 : index
    %126 = vector.load %arg2[%c0_56, %c0_57, %c0_58] : memref<1x3x256xf32, #tpu.memory_space<vmem>>, vector<1x3x256xf32>
    %127 = vector.shape_cast %126 : vector<1x3x256xf32> to vector<3x256xf32>
    %128 = arith.addf %125, %127 : vector<3x256xf32>
    %c0_59 = arith.constant 0 : index
    %c0_60 = arith.constant 0 : index
    %c0_61 = arith.constant 0 : index
    %129 = vector.load %arg8[%c0_59, %c0_60, %c0_61] : memref<1x3x256xf32, #tpu.memory_space<vmem>>, vector<1x3x256xf32>
    %130 = vector.shape_cast %129 : vector<1x3x256xf32> to vector<3x256xf32>
    %131 = vector.shape_cast %128 : vector<3x256xf32> to vector<1x3x256xf32>
    tpu.vector_store %arg8[%c0_59, %c0_60, %c0_61], %131 {strides = array<i32>} : memref<1x3x256xf32, #tpu.memory_space<vmem>>, vector<1x3x256xf32>,
    %c17_i32_62 = arith.constant 17 : i32
    %132 = tpu.dynamic_rotate %128 by %c17_i32_62 dim 1 : vector<3x256xf32>, i32 -> vector<3x256xf32>
    %cst_63 = arith.constant 0.000000e+00 : f32
    %133 = vector.shape_cast %23 : vector<1x256xi1> to vector<1x256xi1>
    %134 = vector.broadcast %133 : vector<1x256xi1> to vector<3x256xi1>
    %135 = vector.broadcast %cst_63 : f32 to vector<3x256xf32>
    %136 = arith.select %134, %132, %135 : vector<3x256xi1>, vector<3x256xf32>
    %c0_64 = arith.constant 0 : index
    %c0_65 = arith.constant 0 : index
    %c0_66 = arith.constant 0 : index
    %137 = vector.load %arg5[%c0_64, %c0_65, %c0_66] : memref<9x8x3xf32, #tpu.memory_space<vmem>>, vector<1x8x3xf32>
    %138 = vector.shape_cast %137 : vector<1x8x3xf32> to vector<8x3xf32>
    %cst_67 = arith.constant dense<0.000000e+00> : vector<8x256xf32>
    %139 = tpu.matmul %138, %136, %cst_67 {dimension_numbers = #tpu.dot_dimension_numbers<[1], [0], [0], [1], [0, 0, 1, 1], [], []>} : vector<8x3xf32>, vector<3x256xf32>, vector<8x256xf32> -> vector<8x256xf32>
    %c16_i32_68 = arith.constant 16 : i32
    %140 = tpu.dynamic_rotate %128 by %c16_i32_68 dim 1 : vector<3x256xf32>, i32 -> vector<3x256xf32>
    %cst_69 = arith.constant 0.000000e+00 : f32
    %141 = vector.shape_cast %25 : vector<1x256xi1> to vector<1x256xi1>
    %142 = vector.broadcast %141 : vector<1x256xi1> to vector<3x256xi1>
    %143 = vector.broadcast %cst_69 : f32 to vector<3x256xf32>
    %144 = arith.select %142, %140, %143 : vector<3x256xi1>, vector<3x256xf32>
    %c1_70 = arith.constant 1 : index
    %c0_71 = arith.constant 0 : index
    %c0_72 = arith.constant 0 : index
    %145 = vector.load %arg5[%c1_70, %c0_71, %c0_72] : memref<9x8x3xf32, #tpu.memory_space<vmem>>, vector<1x8x3xf32>
    %146 = vector.shape_cast %145 : vector<1x8x3xf32> to vector<8x3xf32>
    %cst_73 = arith.constant dense<0.000000e+00> : vector<8x256xf32>
    %147 = tpu.matmul %146, %144, %cst_73 {dimension_numbers = #tpu.dot_dimension_numbers<[1], [0], [0], [1], [0, 0, 1, 1], [], []>} : vector<8x3xf32>, vector<3x256xf32>, vector<8x256xf32> -> vector<8x256xf32>
    %148 = arith.addf %139, %147 : vector<8x256xf32>
    %c15_i32_74 = arith.constant 15 : i32
    %149 = tpu.dynamic_rotate %128 by %c15_i32_74 dim 1 : vector<3x256xf32>, i32 -> vector<3x256xf32>
    %cst_75 = arith.constant 0.000000e+00 : f32
    %150 = vector.shape_cast %30 : vector<1x256xi1> to vector<1x256xi1>
    %151 = vector.broadcast %150 : vector<1x256xi1> to vector<3x256xi1>
    %152 = vector.broadcast %cst_75 : f32 to vector<3x256xf32>
    %153 = arith.select %151, %149, %152 : vector<3x256xi1>, vector<3x256xf32>
    %c2_76 = arith.constant 2 : index
    %c0_77 = arith.constant 0 : index
    %c0_78 = arith.constant 0 : index
    %154 = vector.load %arg5[%c2_76, %c0_77, %c0_78] : memref<9x8x3xf32, #tpu.memory_space<vmem>>, vector<1x8x3xf32>
    %155 = vector.shape_cast %154 : vector<1x8x3xf32> to vector<8x3xf32>
    %cst_79 = arith.constant dense<0.000000e+00> : vector<8x256xf32>
    %156 = tpu.matmul %155, %153, %cst_79 {dimension_numbers = #tpu.dot_dimension_numbers<[1], [0], [0], [1], [0, 0, 1, 1], [], []>} : vector<8x3xf32>, vector<3x256xf32>, vector<8x256xf32> -> vector<8x256xf32>
    %157 = arith.addf %148, %156 : vector<8x256xf32>
    %c1_i32_80 = arith.constant 1 : i32
    %158 = tpu.dynamic_rotate %128 by %c1_i32_80 dim 1 : vector<3x256xf32>, i32 -> vector<3x256xf32>
    %cst_81 = arith.constant 0.000000e+00 : f32
    %159 = vector.shape_cast %32 : vector<1x256xi1> to vector<1x256xi1>
    %160 = vector.broadcast %159 : vector<1x256xi1> to vector<3x256xi1>
    %161 = vector.broadcast %cst_81 : f32 to vector<3x256xf32>
    %162 = arith.select %160, %158, %161 : vector<3x256xi1>, vector<3x256xf32>
    %c3_82 = arith.constant 3 : index
    %c0_83 = arith.constant 0 : index
    %c0_84 = arith.constant 0 : index
    %163 = vector.load %arg5[%c3_82, %c0_83, %c0_84] : memref<9x8x3xf32, #tpu.memory_space<vmem>>, vector<1x8x3xf32>
    %164 = vector.shape_cast %163 : vector<1x8x3xf32> to vector<8x3xf32>
    %cst_85 = arith.constant dense<0.000000e+00> : vector<8x256xf32>
    %165 = tpu.matmul %164, %162, %cst_85 {dimension_numbers = #tpu.dot_dimension_numbers<[1], [0], [0], [1], [0, 0, 1, 1], [], []>} : vector<8x3xf32>, vector<3x256xf32>, vector<8x256xf32> -> vector<8x256xf32>
    %166 = arith.addf %157, %165 : vector<8x256xf32>
    %c4_86 = arith.constant 4 : index
    %c0_87 = arith.constant 0 : index
    %c0_88 = arith.constant 0 : index
    %167 = vector.load %arg5[%c4_86, %c0_87, %c0_88] : memref<9x8x3xf32, #tpu.memory_space<vmem>>, vector<1x8x3xf32>
    %168 = vector.shape_cast %167 : vector<1x8x3xf32> to vector<8x3xf32>
    %cst_89 = arith.constant dense<0.000000e+00> : vector<8x256xf32>
    %169 = tpu.matmul %168, %128, %cst_89 {dimension_numbers = #tpu.dot_dimension_numbers<[1], [0], [0], [1], [0, 0, 1, 1], [], []>} : vector<8x3xf32>, vector<3x256xf32>, vector<8x256xf32> -> vector<8x256xf32>
    %170 = arith.addf %166, %169 : vector<8x256xf32>
    %c255_i32_90 = arith.constant 255 : i32
    %171 = tpu.dynamic_rotate %128 by %c255_i32_90 dim 1 : vector<3x256xf32>, i32 -> vector<3x256xf32>
    %cst_91 = arith.constant 0.000000e+00 : f32
    %172 = vector.shape_cast %34 : vector<1x256xi1> to vector<1x256xi1>
    %173 = vector.broadcast %172 : vector<1x256xi1> to vector<3x256xi1>
    %174 = vector.broadcast %cst_91 : f32 to vector<3x256xf32>
    %175 = arith.select %173, %171, %174 : vector<3x256xi1>, vector<3x256xf32>
    %c5_92 = arith.constant 5 : index
    %c0_93 = arith.constant 0 : index
    %c0_94 = arith.constant 0 : index
    %176 = vector.load %arg5[%c5_92, %c0_93, %c0_94] : memref<9x8x3xf32, #tpu.memory_space<vmem>>, vector<1x8x3xf32>
    %177 = vector.shape_cast %176 : vector<1x8x3xf32> to vector<8x3xf32>
    %cst_95 = arith.constant dense<0.000000e+00> : vector<8x256xf32>
    %178 = tpu.matmul %177, %175, %cst_95 {dimension_numbers = #tpu.dot_dimension_numbers<[1], [0], [0], [1], [0, 0, 1, 1], [], []>} : vector<8x3xf32>, vector<3x256xf32>, vector<8x256xf32> -> vector<8x256xf32>
    %179 = arith.addf %170, %178 : vector<8x256xf32>
    %c241_i32_96 = arith.constant 241 : i32
    %180 = tpu.dynamic_rotate %128 by %c241_i32_96 dim 1 : vector<3x256xf32>, i32 -> vector<3x256xf32>
    %cst_97 = arith.constant 0.000000e+00 : f32
    %181 = vector.shape_cast %39 : vector<1x256xi1> to vector<1x256xi1>
    %182 = vector.broadcast %181 : vector<1x256xi1> to vector<3x256xi1>
    %183 = vector.broadcast %cst_97 : f32 to vector<3x256xf32>
    %184 = arith.select %182, %180, %183 : vector<3x256xi1>, vector<3x256xf32>
    %c6_98 = arith.constant 6 : index
    %c0_99 = arith.constant 0 : index
    %c0_100 = arith.constant 0 : index
    %185 = vector.load %arg5[%c6_98, %c0_99, %c0_100] : memref<9x8x3xf32, #tpu.memory_space<vmem>>, vector<1x8x3xf32>
    %186 = vector.shape_cast %185 : vector<1x8x3xf32> to vector<8x3xf32>
    %cst_101 = arith.constant dense<0.000000e+00> : vector<8x256xf32>
    %187 = tpu.matmul %186, %184, %cst_101 {dimension_numbers = #tpu.dot_dimension_numbers<[1], [0], [0], [1], [0, 0, 1, 1], [], []>} : vector<8x3xf32>, vector<3x256xf32>, vector<8x256xf32> -> vector<8x256xf32>
    %188 = arith.addf %179, %187 : vector<8x256xf32>
    %c240_i32_102 = arith.constant 240 : i32
    %189 = tpu.dynamic_rotate %128 by %c240_i32_102 dim 1 : vector<3x256xf32>, i32 -> vector<3x256xf32>
    %cst_103 = arith.constant 0.000000e+00 : f32
    %190 = vector.shape_cast %41 : vector<1x256xi1> to vector<1x256xi1>
    %191 = vector.broadcast %190 : vector<1x256xi1> to vector<3x256xi1>
    %192 = vector.broadcast %cst_103 : f32 to vector<3x256xf32>
    %193 = arith.select %191, %189, %192 : vector<3x256xi1>, vector<3x256xf32>
    %c7_104 = arith.constant 7 : index
    %c0_105 = arith.constant 0 : index
    %c0_106 = arith.constant 0 : index
    %194 = vector.load %arg5[%c7_104, %c0_105, %c0_106] : memref<9x8x3xf32, #tpu.memory_space<vmem>>, vector<1x8x3xf32>
    %195 = vector.shape_cast %194 : vector<1x8x3xf32> to vector<8x3xf32>
    %cst_107 = arith.constant dense<0.000000e+00> : vector<8x256xf32>
    %196 = tpu.matmul %195, %193, %cst_107 {dimension_numbers = #tpu.dot_dimension_numbers<[1], [0], [0], [1], [0, 0, 1, 1], [], []>} : vector<8x3xf32>, vector<3x256xf32>, vector<8x256xf32> -> vector<8x256xf32>
    %197 = arith.addf %188, %196 : vector<8x256xf32>
    %c239_i32_108 = arith.constant 239 : i32
    %198 = tpu.dynamic_rotate %128 by %c239_i32_108 dim 1 : vector<3x256xf32>, i32 -> vector<3x256xf32>
    %cst_109 = arith.constant 0.000000e+00 : f32
    %199 = vector.shape_cast %46 : vector<1x256xi1> to vector<1x256xi1>
    %200 = vector.broadcast %199 : vector<1x256xi1> to vector<3x256xi1>
    %201 = vector.broadcast %cst_109 : f32 to vector<3x256xf32>
    %202 = arith.select %200, %198, %201 : vector<3x256xi1>, vector<3x256xf32>
    %c8_110 = arith.constant 8 : index
    %c0_111 = arith.constant 0 : index
    %c0_112 = arith.constant 0 : index
    %203 = vector.load %arg5[%c8_110, %c0_111, %c0_112] : memref<9x8x3xf32, #tpu.memory_space<vmem>>, vector<1x8x3xf32>
    %204 = vector.shape_cast %203 : vector<1x8x3xf32> to vector<8x3xf32>
    %cst_113 = arith.constant dense<0.000000e+00> : vector<8x256xf32>
    %205 = tpu.matmul %204, %202, %cst_113 {dimension_numbers = #tpu.dot_dimension_numbers<[1], [0], [0], [1], [0, 0, 1, 1], [], []>} : vector<8x3xf32>, vector<3x256xf32>, vector<8x256xf32> -> vector<8x256xf32>
    %206 = arith.addf %197, %205 : vector<8x256xf32>
    %c0_114 = arith.constant 0 : index
    %c0_115 = arith.constant 0 : index
    %207 = vector.load %arg6[%c0_114, %c0_115] : memref<8x1xf32, #tpu.memory_space<vmem>>, vector<8x1xf32>
    %208 = vector.broadcast %207 : vector<8x1xf32> to vector<8x256xf32>
    %209 = arith.addf %206, %208 : vector<8x256xf32>
    %210 = arith.negf %209 : vector<8x256xf32>
    %211 = math.exp %210 : vector<8x256xf32>
    %cst_116 = arith.constant 1.000000e+00 : f32
    %212 = vector.broadcast %cst_116 : f32 to vector<8x256xf32>
    %213 = arith.addf %212, %211 : vector<8x256xf32>
    %214 = arith.divf %212, %213 : vector<8x256xf32>
    %215 = vector.extract_strided_slice %124 {offsets = [0, 0], sizes = [8, 256], strides = [1, 1]} : vector<11x256xf32> to vector<8x256xf32>
    %216 = arith.mulf %215, %214 : vector<8x256xf32>
    %217 = arith.addf %216, %1 : vector<8x256xf32>
    %c0_117 = arith.constant 0 : index
    %c0_118 = arith.constant 0 : index
    %c0_119 = arith.constant 0 : index
    %218 = vector.load %arg7[%c0_117, %c0_118, %c0_119] : memref<1x8x256xf32, #tpu.memory_space<vmem>>, vector<1x8x256xf32>
    %219 = vector.shape_cast %218 : vector<1x8x256xf32> to vector<8x256xf32>
    %220 = vector.shape_cast %217 : vector<8x256xf32> to vector<1x8x256xf32>
    tpu.vector_store %arg7[%c0_117, %c0_118, %c0_119], %220 {strides = array<i32>} : memref<1x8x256xf32, #tpu.memory_space<vmem>>, vector<1x8x256xf32>,
    return
  }
  func.func @transform_0(%arg0: i32) -> (i32, i32, i32) {
    %c0_i32 = arith.constant 0 : i32
    %c0_i32_0 = arith.constant 0 : i32
    %c0_i32_1 = arith.constant 0 : i32
    return %arg0, %c0_i32, %c0_i32_0 : i32, i32, i32
  }
  func.func @transform_1(%arg0: i32) -> (i32, i32, i32) {
    %c0_i32 = arith.constant 0 : i32
    %c0_i32_0 = arith.constant 0 : i32
    %c0_i32_1 = arith.constant 0 : i32
    return %arg0, %c0_i32, %c0_i32_0 : i32, i32, i32
  }
  func.func @transform_2(%arg0: i32) -> (i32, i32, i32) {
    %c0_i32 = arith.constant 0 : i32
    %c0_i32_0 = arith.constant 0 : i32
    %c0_i32_1 = arith.constant 0 : i32
    %c0_i32_2 = arith.constant 0 : i32
    return %c0_i32, %c0_i32_0, %c0_i32_1 : i32, i32, i32
  }
  func.func @transform_3(%arg0: i32) -> (i32, i32) {
    %c0_i32 = arith.constant 0 : i32
    %c0_i32_0 = arith.constant 0 : i32
    %c0_i32_1 = arith.constant 0 : i32
    return %c0_i32, %c0_i32_0 : i32, i32
  }
  func.func @transform_4(%arg0: i32) -> (i32, i32, i32) {
    %c0_i32 = arith.constant 0 : i32
    %c0_i32_0 = arith.constant 0 : i32
    %c0_i32_1 = arith.constant 0 : i32
    %c0_i32_2 = arith.constant 0 : i32
    return %c0_i32, %c0_i32_0, %c0_i32_1 : i32, i32, i32
  }
  func.func @transform_5(%arg0: i32) -> (i32, i32) {
    %c0_i32 = arith.constant 0 : i32
    %c0_i32_0 = arith.constant 0 : i32
    %c0_i32_1 = arith.constant 0 : i32
    return %c0_i32, %c0_i32_0 : i32, i32
  }
  func.func @transform_6(%arg0: i32) -> (i32, i32, i32) {
    %c0_i32 = arith.constant 0 : i32
    %c0_i32_0 = arith.constant 0 : i32
    %c0_i32_1 = arith.constant 0 : i32
    return %arg0, %c0_i32, %c0_i32_0 : i32, i32, i32
  }
  func.func @transform_7(%arg0: i32) -> (i32, i32, i32) {
    %c0_i32 = arith.constant 0 : i32
    %c0_i32_0 = arith.constant 0 : i32
    %c0_i32_1 = arith.constant 0 : i32
    return %arg0, %c0_i32, %c0_i32_0 : i32, i32, i32
  }
}

</mosaic_0001>

<llo_original>
// kernel: tpu_custom_call.1
$region0: #{tpu_custom_call.1}
  #allocation0 [shape = 'u32[]', space=smem, size = 0x4, offset = 0x4, fixed_abs, tag = 'smem constant byte address 0x4 - core index']
  #allocation1 [shape = 'u32[144,128]{1,0:T(1,128)}', space=vmem, size = 0x12000, scoped, tag = 'internal scratch']
  %s0 = inlined_call_operand.vmem [shape: f32[2,8,256], index: 0, kind: input, shape index: {}]
  %s1 = inlined_call_operand.vmem [shape: f32[2,3,256], index: 1, kind: input, shape index: {}]
  %s2 = inlined_call_operand.vmem [shape: f32[9,11,8], index: 2, kind: input, shape index: {}]
  %s3 = inlined_call_operand.vmem [shape: f32[11,1], index: 3, kind: input, shape index: {}]
  %s4 = inlined_call_operand.vmem [shape: f32[9,8,3], index: 4, kind: input, shape index: {}]
  %s5 = inlined_call_operand.vmem [shape: f32[8,1], index: 5, kind: input, shape index: {}]
  %s6 = inlined_call_operand.hbm [shape: f32[2,8,256], index: 6, kind: output, shape index: {0}]
  %s7 = inlined_call_operand.vmem [shape: f32[2,3,256], index: 7, kind: output, shape index: {1}]
  %8 = xla_tuple %s6, %s7
  %s9 = sld [smem:[#allocation0]]
  $region65: #{tpu_custom_call.1} parent=0
    _
  %s11 = ssub.s32 1, %s9
  %s12 = scalar_select 0, %s11, %s9
  $region1: #{tpu_custom_call.1} parent=0
    #allocation2 [shape = 'u8[16384]{0}', space=vmem, size = 0x4000, scoped, tag = 'output window, operand 0']
    #allocation3 [shape = 's32[2]{0}', space=sflag, size = 0x8, scoped, tag = 'scoped memory for tpu_custom_call.1']
    %13 = vsyncpa [#allocation3], 0
    %s14 = scalar_lea.sflag [#allocation3], 1
    %15 = vsyncpa %s14, 0
    loop: start=0, step=1, limit=4
    $region2: #{tpu_custom_call.1} parent=1 // loop_pre_header
      _
    $region3: #{tpu_custom_call.1} parent=1 // loop_header
      %s17 = sphi 0, %s21
      %p18 = scmp.ge.s32.totalorder %s17, 4
      %s27 = sphi 0, %s29
      %s30 = sphi 0, %s27
      %s31 = sphi 0, %s30
      %s47 = sphi 0, %s31
      %s53 = sphi 0, %s55
      %s56 = sphi 0, %s53
      %s57 = sphi 0, %s56
      %s73 = sphi 0, %s57
      %s77 = sphi 0, %s77
      %s79 = sphi 0, %s77
      %s80 = sphi 0, %s79
      %s94 = sphi 0, %s80
      %s98 = sphi 0, %s98
      %s100 = sphi 0, %s98
      %s101 = sphi 0, %s100
      %s115 = sphi 0, %s101
      %s119 = sphi 0, %s119
      %s121 = sphi 0, %s119
      %s122 = sphi 0, %s121
      %s136 = sphi 0, %s122
      %s140 = sphi 0, %s140
      %s142 = sphi 0, %s140
      %s143 = sphi 0, %s142
      %s157 = sphi 0, %s143
      %s163 = sphi 0, %s165
      %s166 = sphi 0, %s163
      %s167 = sphi 0, %s166
      %s183 = sphi 0, %s167
      %s189 = sphi 0, %s191
      %s192 = sphi 0, %s189
      %s193 = sphi 0, %s192
      %s209 = sphi 0, %s193
    $region4: #{tpu_custom_call.1} parent=1 // loop_header_branch
      %20 = sbr.rel (%p18) target = $region8
    $region5: #{tpu_custom_call.1} parent=1 // loop_body
      %s22 = ssub.s32 %s17, 1
      %s23 = ssub.s32 %s17, 2
      %s24 = sadd.s32 %s17, 1
      %s25 = ssub.s32 %s17, %s24
      %p26 = scmp.eq.s32.totalorder %s25, 0
      %s28 = sadd.s32 %s27, 1
      %s29 = scalar_select %p26, %s27, %s28
      %p32 = pneg %p26
      %p33 = scmp.eq.s32.totalorder %s17, 1
      %p34 = por %p32, %p33
      %p35 = scmp.ne.s32.totalorder %s27, %s30
      %p36 = scmp.eq.s32.totalorder %s17, 0
      %p37 = por %p35, %p36
      %p38 = scmp.ne.s32.totalorder %s27, %s30
      %p39 = scmp.eq.s32.totalorder %s22, 1
      %p40 = por %p38, %p39
      %p41 = scmp.ne.s32.totalorder %s30, %s31
      %p42 = scmp.eq.s32.totalorder %s22, 0
      %p43 = por %p41, %p42
      %p44 = scmp.ne.s32.totalorder %s30, %s31
      %p45 = scmp.eq.s32.totalorder %s23, 1
      %p46 = por %p44, %p45
      %p48 = scmp.ne.s32.totalorder %s31, %s47
      %p49 = scmp.eq.s32.totalorder %s23, 0
      %p50 = por %p48, %p49
      %s51 = ssub.s32 %s17, %s24
      %p52 = scmp.eq.s32.totalorder %s51, 0
      %s54 = sadd.s32 %s53, 1
      %s55 = scalar_select %p52, %s53, %s54
      %p58 = pneg %p52
      %p59 = scmp.eq.s32.totalorder %s17, 1
      %p60 = por %p58, %p59
      %p61 = scmp.ne.s32.totalorder %s53, %s56
      %p62 = scmp.eq.s32.totalorder %s17, 0
      %p63 = por %p61, %p62
      %p64 = scmp.ne.s32.totalorder %s53, %s56
      %p65 = scmp.eq.s32.totalorder %s22, 1
      %p66 = por %p64, %p65
      %p67 = scmp.ne.s32.totalorder %s56, %s57
      %p68 = scmp.eq.s32.totalorder %s22, 0
      %p69 = por %p67, %p68
      %p70 = scmp.ne.s32.totalorder %s56, %s57
      %p71 = scmp.eq.s32.totalorder %s23, 1
      %p72 = por %p70, %p71
      %p74 = scmp.ne.s32.totalorder %s57, %s73
      %p75 = scmp.eq.s32.totalorder %s23, 0
      %p76 = por %p74, %p75
      %s78 = sadd.s32 %s77, 1
      %p81 = scmp.eq.s32.totalorder %s17, 1
      %p82 = scmp.ne.s32.totalorder %s77, %s79
      %p83 = scmp.eq.s32.totalorder %s17, 0
      %p84 = por %p82, %p83
      %p85 = scmp.ne.s32.totalorder %s77, %s79
      %p86 = scmp.eq.s32.totalorder %s22, 1
      %p87 = por %p85, %p86
      %p88 = scmp.ne.s32.totalorder %s79, %s80
      %p89 = scmp.eq.s32.totalorder %s22, 0
      %p90 = por %p88, %p89
      %p91 = scmp.ne.s32.totalorder %s79, %s80
      %p92 = scmp.eq.s32.totalorder %s23, 1
      %p93 = por %p91, %p92
      %p95 = scmp.ne.s32.totalorder %s80, %s94
      %p96 = scmp.eq.s32.totalorder %s23, 0
      %p97 = por %p95, %p96
      %s99 = sadd.s32 %s98, 1
      %p102 = scmp.eq.s32.totalorder %s17, 1
      %p103 = scmp.ne.s32.totalorder %s98, %s100
      %p104 = scmp.eq.s32.totalorder %s17, 0
      %p105 = por %p103, %p104
      %p106 = scmp.ne.s32.totalorder %s98, %s100
      %p107 = scmp.eq.s32.totalorder %s22, 1
      %p108 = por %p106, %p107
      %p109 = scmp.ne.s32.totalorder %s100, %s101
      %p110 = scmp.eq.s32.totalorder %s22, 0
      %p111 = por %p109, %p110
      %p112 = scmp.ne.s32.totalorder %s100, %s101
      %p113 = scmp.eq.s32.totalorder %s23, 1
      %p114 = por %p112, %p113
      %p116 = scmp.ne.s32.totalorder %s101, %s115
      %p117 = scmp.eq.s32.totalorder %s23, 0
      %p118 = por %p116, %p117
      %s120 = sadd.s32 %s119, 1
      %p123 = scmp.eq.s32.totalorder %s17, 1
      %p124 = scmp.ne.s32.totalorder %s119, %s121
      %p125 = scmp.eq.s32.totalorder %s17, 0
      %p126 = por %p124, %p125
      %p127 = scmp.ne.s32.totalorder %s119, %s121
      %p128 = scmp.eq.s32.totalorder %s22, 1
      %p129 = por %p127, %p128
      %p130 = scmp.ne.s32.totalorder %s121, %s122
      %p131 = scmp.eq.s32.totalorder %s22, 0
      %p132 = por %p130, %p131
      %p133 = scmp.ne.s32.totalorder %s121, %s122
      %p134 = scmp.eq.s32.totalorder %s23, 1
      %p135 = por %p133, %p134
      %p137 = scmp.ne.s32.totalorder %s122, %s136
      %p138 = scmp.eq.s32.totalorder %s23, 0
      %p139 = por %p137, %p138
      %s141 = sadd.s32 %s140, 1
      %p144 = scmp.eq.s32.totalorder %s17, 1
      %p145 = scmp.ne.s32.totalorder %s140, %s142
      %p146 = scmp.eq.s32.totalorder %s17, 0
      %p147 = por %p145, %p146
      %p148 = scmp.ne.s32.totalorder %s140, %s142
      %p149 = scmp.eq.s32.totalorder %s22, 1
      %p150 = por %p148, %p149
      %p151 = scmp.ne.s32.totalorder %s142, %s143
      %p152 = scmp.eq.s32.totalorder %s22, 0
      %p153 = por %p151, %p152
      %p154 = scmp.ne.s32.totalorder %s142, %s143
      %p155 = scmp.eq.s32.totalorder %s23, 1
      %p156 = por %p154, %p155
      %p158 = scmp.ne.s32.totalorder %s143, %s157
      %p159 = scmp.eq.s32.totalorder %s23, 0
      %p160 = por %p158, %p159
      %s161 = ssub.s32 %s17, %s24
      %p162 = scmp.eq.s32.totalorder %s161, 0
      %s164 = sadd.s32 %s163, 1
      %s165 = scalar_select %p162, %s163, %s164
      %p168 = pneg %p162
      %p169 = scmp.eq.s32.totalorder %s17, 1
      %p170 = por %p168, %p169
      %p171 = scmp.ne.s32.totalorder %s163, %s166
      %p172 = scmp.eq.s32.totalorder %s17, 0
      %p173 = por %p171, %p172
      %p174 = scmp.ne.s32.totalorder %s163, %s166
      %p175 = scmp.eq.s32.totalorder %s22, 1
      %p176 = por %p174, %p175
      %p177 = scmp.ne.s32.totalorder %s166, %s167
      %p178 = scmp.eq.s32.totalorder %s22, 0
      %p179 = por %p177, %p178
      %p180 = scmp.ne.s32.totalorder %s166, %s167
      %p181 = scmp.eq.s32.totalorder %s23, 1
      %p182 = por %p180, %p181
      %p184 = scmp.ne.s32.totalorder %s167, %s183
      %p185 = scmp.eq.s32.totalorder %s23, 0
      %p186 = por %p184, %p185
      %s187 = ssub.s32 %s17, %s24
      %p188 = scmp.eq.s32.totalorder %s187, 0
      %s190 = sadd.s32 %s189, 1
      %s191 = scalar_select %p188, %s189, %s190
      %p194 = pneg %p188
      %p195 = scmp.eq.s32.totalorder %s17, 1
      %p196 = por %p194, %p195
      %p197 = scmp.ne.s32.totalorder %s189, %s192
      %p198 = scmp.eq.s32.totalorder %s17, 0
      %p199 = por %p197, %p198
      %p200 = scmp.ne.s32.totalorder %s189, %s192
      %p201 = scmp.eq.s32.totalorder %s22, 1
      %p202 = por %p200, %p201
      %p203 = scmp.ne.s32.totalorder %s192, %s193
      %p204 = scmp.eq.s32.totalorder %s22, 0
      %p205 = por %p203, %p204
      %p206 = scmp.ne.s32.totalorder %s192, %s193
      %p207 = scmp.eq.s32.totalorder %s23, 1
      %p208 = por %p206, %p207
      %p210 = scmp.ne.s32.totalorder %s193, %s209
      %p211 = scmp.eq.s32.totalorder %s23, 0
      %p212 = por %p210, %p211
      %p213 = scmp.le.s32.totalorder 1, %s17
      %p214 = scmp.lt.s32.totalorder %s17, 3
      %p215 = pnand %p213, %p214
      %p216 = pneg %p215
      // Predicated region
      $region9: #{tpu_custom_call.1} parent=5 // pred_check
        _
      $region10: #{tpu_custom_call.1} parent=5 // pred_check_branch
        %218 = sbr.rel (%p215) target = $region12
      $region11: #{tpu_custom_call.1} parent=5 // pred_region
        %s219 = ssub.s32 %s17, 1
        // Predicated region
        $region13: #{tpu_custom_call.1} parent=11 // pred_check
          %p220 = pneg %p90
        $region14: #{tpu_custom_call.1} parent=11 // pred_check_branch
          %222 = sbr.rel (%p220) target = $region16
        $region15: #{tpu_custom_call.1} parent=11 // pred_region
          _
        $region16: #{tpu_custom_call.1} parent=11 // pred_fallthru
          _
        // Predicated region
        $region17: #{tpu_custom_call.1} parent=11 // pred_check
          %p223 = pneg %p111
        $region18: #{tpu_custom_call.1} parent=11 // pred_check_branch
          %225 = sbr.rel (%p223) target = $region20
        $region19: #{tpu_custom_call.1} parent=11 // pred_region
          _
        $region20: #{tpu_custom_call.1} parent=11 // pred_fallthru
          _
        // Predicated region
        $region21: #{tpu_custom_call.1} parent=11 // pred_check
          %p226 = pneg %p132
        $region22: #{tpu_custom_call.1} parent=11 // pred_check_branch
          %228 = sbr.rel (%p226) target = $region24
        $region23: #{tpu_custom_call.1} parent=11 // pred_region
          _
        $region24: #{tpu_custom_call.1} parent=11 // pred_fallthru
          _
        // Predicated region
        $region25: #{tpu_custom_call.1} parent=11 // pred_check
          %p229 = pneg %p153
        $region26: #{tpu_custom_call.1} parent=11 // pred_check_branch
          %231 = sbr.rel (%p229) target = $region28
        $region27: #{tpu_custom_call.1} parent=11 // pred_region
          _
        $region28: #{tpu_custom_call.1} parent=11 // pred_fallthru
          _
      $region12: #{tpu_custom_call.1} parent=5 // pred_fallthru
        _
      %p232 = scmp.lt.s32.totalorder %s17, 2
      // Predicated region
      $region29: #{tpu_custom_call.1} parent=5 // pred_check
        %p233 = pneg %p232
      $region30: #{tpu_custom_call.1} parent=5 // pred_check_branch
        %235 = sbr.rel (%p233) target = $region32
      $region31: #{tpu_custom_call.1} parent=5 // pred_region
        // Predicated region
        $region33: #{tpu_custom_call.1} parent=31 // pred_check
          %p236 = pneg %p37
        $region34: #{tpu_custom_call.1} parent=31 // pred_check_branch
          %238 = sbr.rel (%p236) target = $region36
        $region35: #{tpu_custom_call.1} parent=31 // pred_region
          %p239 = scmp.lt.s32.totalorder %s17, 1
          %s240 = scalar_select %p239, %s17, 1
          %s241 = smul.addr %s240, 2
          %s242 = smul.addr %s241, 8
          %s243 = scalar_lea.vmem %s0, %s242
        $region36: #{tpu_custom_call.1} parent=31 // pred_fallthru
          _
        // Predicated region
        $region37: #{tpu_custom_call.1} parent=31 // pred_check
          %p244 = pneg %p63
        $region38: #{tpu_custom_call.1} parent=31 // pred_check_branch
          %246 = sbr.rel (%p244) target = $region40
        $region39: #{tpu_custom_call.1} parent=31 // pred_region
          %p247 = scmp.lt.s32.totalorder %s17, 1
          %s248 = scalar_select %p247, %s17, 1
          %s249 = smul.addr %s248, 2
          %s250 = smul.addr %s249, 4
          %s251 = scalar_lea.vmem %s1, %s250
        $region40: #{tpu_custom_call.1} parent=31 // pred_fallthru
          _
      $region32: #{tpu_custom_call.1} parent=5 // pred_fallthru
        _
      %p252 = scmp.le.s32.totalorder 1, %s17
      %p253 = scmp.lt.s32.totalorder %s17, 3
      %p254 = pnand %p252, %p253
      %p255 = pneg %p254
      // Predicated region
      $region41: #{tpu_custom_call.1} parent=5 // pred_check
        _
      $region42: #{tpu_custom_call.1} parent=5 // pred_check_branch
        %257 = sbr.rel (%p254) target = $region44
      $region43: #{tpu_custom_call.1} parent=5 // pred_region
        %s258 = ssub.s32 %s17, 1
        %p259 = scmp.lt.s32.totalorder %s22, 1
        %s260 = scalar_select %p259, %s22, 1
        %s261 = smul.addr %s260, 2
        %s262 = smul.addr %s261, 8
        %s263 = scalar_lea.vmem %s0, %s262
        %p264 = pneg %p43
        %p265 = pneg %p40
        %p266 = scmp.lt.s32.totalorder %s22, 1
        %s267 = scalar_select %p266, %s22, 1
        %s268 = smul.addr %s267, 2
        %s269 = smul.addr %s268, 4
        %s270 = scalar_lea.vmem %s1, %s269
        %p271 = pneg %p69
        %p272 = pneg %p66
        %p273 = pneg %p90
        %p274 = pneg %p87
        %p275 = pneg %p111
        %p276 = pneg %p108
        %p277 = pneg %p132
        %p278 = pneg %p129
        %p279 = pneg %p153
        %p280 = pneg %p150
        %p281 = pneg %p179
        %p282 = pneg %p176
        %s283 = sand.u32 %s166, 1
        %s284 = scalar_lea.sflag [#allocation3], %s283
        %s285 = sand.u32 %s166, 1
        %s286 = smul.addr %s285, 16
        %s287 = scalar_lea.vmem [#allocation2], %s286
        %p288 = pneg %p205
        %p289 = pneg %p202
        %p290 = scmp.lt.s32.totalorder %s22, 1
        %s291 = scalar_select %p290, %s22, 1
        %s292 = smul.addr %s291, 2
        %s293 = smul.addr %s292, 4
        %s294 = scalar_lea.vmem %s7, %s293
        %p295 = scmp.lt.s32.totalorder %s22, 1
        %s296 = scalar_select %p295, %s22, 1
        %s297 = smul.addr %s296, 2
        %s298 = smul.addr %s297, 8
        %s299 = scalar_lea.vmem %s0, %s298
        %p300 = scmp.lt.s32.totalorder %s22, 1
        %s301 = scalar_select %p300, %s22, 1
        %s302 = smul.addr %s301, 2
        %s303 = smul.addr %s302, 4
        %s304 = scalar_lea.vmem %s1, %s303
        %p305 = scmp.lt.s32.totalorder %s22, 1
        %s306 = scalar_select %p305, %s22, 1
        %s307 = smul.addr %s306, 2
        %s308 = smul.addr %s307, 4
        %s309 = scalar_lea.vmem %s7, %s308
        %v310 = vld [vmem:[%s299] sm:$0xff]
        %v311 = vld [vmem:[%s299 + $0x8] sm:$0xff]
        %v312 = vlaneseq
        %v313 = vand.u32 %v312, 127
        %v314 = vadd.s32 %v313, 128
        %vm315 = vcmp.lt.s32.totalorder %v313, 0
        %v316 = vsub.s32 0, %v313
        %v317 = vsel %vm315, %v316, %v313
        %v318 = vshrl.u32 %v317, 4
        %v319 = vand.u32 %v317, 15
        %v320 = vsub.s32 0, %v319
        %v321 = vsel %vm315, %v320, %v319
        %vm322 = vcmp.lt.s32.totalorder %v314, 0
        %v323 = vsub.s32 0, %v314
        %v324 = vsel %vm322, %v323, %v314
        %v325 = vshrl.u32 %v324, 4
        %v326 = vand.u32 %v324, 15
        %v327 = vsub.s32 0, %v326
        %v328 = vsel %vm322, %v327, %v326
        %vm329 = vcmp.ne.s32.totalorder %v321, 0
        %vm330 = vcmp.ne.s32.totalorder %v328, 0
        %vm331 = vcmp.lt.s32.totalorder %v321, 0
        %vm332 = vcmp.lt.s32.totalorder %v328, 0
        %vm333 = vmand %vm331, %vm329
        %vm334 = vmand %vm332, %vm330
        %v335 = vadd.s32 %v321, 16
        %v336 = vadd.s32 %v328, 16
        %v337 = vsel %vm333, %v335, %v321
        %v338 = vsel %vm334, %v336, %v328
        %vm339 = vcmp.ge.s32.totalorder %v313, 16
        %vm340 = vcmp.ge.s32.totalorder %v314, 16
        %vm341 = vcmp.ge.s32.totalorder %v337, 1
        %vm342 = vcmp.ge.s32.totalorder %v338, 1
        %vm343 = vmand %vm339, %vm341
        %vm344 = vmand %vm340, %vm342
        %vm345 = vcmp.lt.s32.totalorder %v337, 15
        %vm346 = vcmp.lt.s32.totalorder %v338, 15
        %vm347 = vmand %vm339, %vm345
        %vm348 = vmand %vm340, %vm346
        %vm349 = vcmp.lt.s32.totalorder %v313, 240
        %vm350 = vcmp.lt.s32.totalorder %v314, 240
        %vm351 = vmand %vm349, %vm341
        %vm352 = vmand %vm350, %vm342
        %vm353 = vmand %vm349, %vm345
        %vm354 = vmand %vm350, %vm346
        %355 = vrot.lane.b32.xlu0 %v310, 17
        %v356 = vpop.permute.xlu0 %355
        %357 = vrot.lane.b32.xlu0 %v311, 17
        %v358 = vpop.permute.xlu0 %357
        %vm359 = vcmp.lt.s32.totalorder %v313, 17
        %v360 = vsel %vm359, %v356, %v358
        %v361 = vsel %vm359, %v358, %v356
        %v362 = vsel %vm343, 1, 0
        %v363 = vsel %vm344, 1, 0
        %vm364 = vcmp.eq.s32.totalorder %v362, 1
        %vm365 = vcmp.eq.s32.totalorder %v363, 1
        %v366 = vsel %vm364, %v361, 0.0
        %v367 = vsel %vm365, %v360, 0.0
        %v368 = vld [vmem:[%s2] sm:$0xff]
        %v369 = vld [vmem:[%s2 + $0x8] sm:$0x7]
        %370 = vrot.lane.b32.xlu0 %v310, 16
        %v371 = vpop.permute.xlu0 %370
        %372 = vrot.lane.b32.xlu0 %v311, 16
        %v373 = vpop.permute.xlu0 %372
        %vm374 = vcmp.lt.s32.totalorder %v313, 16
        %v375 = vsel %vm374, %v371, %v373
        %v376 = vsel %vm374, %v373, %v371
        %v377 = vsel %vm339, 1, 0
        %v378 = vsel %vm340, 1, 0
        %vm379 = vcmp.eq.s32.totalorder %v377, 1
        %vm380 = vcmp.eq.s32.totalorder %v378, 1
        %v381 = vsel %vm379, %v376, 0.0
        %v382 = vsel %vm380, %v375, 0.0
        %s383 = scalar_lea.vmem %s2, 16
        %v384 = vld [vmem:[%s383] sm:$0xff]
        %v385 = vld [vmem:[%s383 + $0x8] sm:$0x7]
        %vm386 = vcmask 64512
        %v388 = vsel %vm386, %v384, 0
        %v391 = vsel %vm386, %v385, 0
        %393 = vmatprep.subr.mxu0 %v382
        %394 = vmatpush1.msra.mxu0 %v381
        %395 = vmatprep.subr.mxu0 0.0
        %396 = vmatpush1.msra.mxu0 0.0
        %397 = vmatprep.subr.mxu0 0.0
        %398 = vmatpush1.msra.mxu0 0.0
        %399 = vmatprep.subr.mxu0 0.0
        %400 = vmatpush1.msra.mxu0 0.0
        %401 = vmatprep.subr.mxu0 0.0
        %402 = vmatpush1.msra.mxu0 0.0
        %403 = vmatprep.subr.mxu0 0.0
        %404 = vmatpush1.msra.mxu0 0.0
        %405 = vmatprep.subr.mxu0 0.0
        %406 = vmatpush1.msra.mxu0 0.0
        %407 = vmatprep.subr.mxu0 0.0
        %408 = vmatpush1.msra.mxu0 0.0
        %409 = vmatprep.subr.mxu0 0.0
        %410 = vmatpush1.msra.mxu0 0.0
        %411 = vmatprep.subr.mxu0 0.0
        %412 = vmatpush1.msra.mxu0 0.0
        %413 = vmatprep.subr.mxu0 0.0
        %414 = vmatpush1.msra.mxu0 0.0
        %415 = vmatprep.subr.mxu0 0.0
        %416 = vmatpush1.msra.mxu0 0.0
        %417 = vmatprep.subr.mxu0 0.0
        %418 = vmatpush1.msra.mxu0 0.0
        %419 = vmatprep.subr.mxu0 0.0
        %420 = vmatpush1.msra.mxu0 0.0
        %421 = vmatprep.subr.mxu0 0.0
        %422 = vmatpush1.msra.mxu0 0.0
        %423 = vmatprep.subr.mxu0 0.0
        %424 = vmatpush1.msra.mxu0 0.0
        %425 = vmatprep.subr.mxu0 0.0
        %426 = vmatpush1.msra.mxu0 0.0
        %427 = vmatprep.subr.mxu0 0.0
        %428 = vmatpush1.msra.mxu0 0.0
        %429 = vmatprep.subr.mxu0 0.0
        %430 = vmatpush1.msra.mxu0 0.0
        %431 = vmatprep.subr.mxu0 0.0
        %432 = vmatpush1.msra.mxu0 0.0
        %433 = vmatprep.subr.mxu0 0.0
        %434 = vmatpush1.msra.mxu0 0.0
        %435 = vmatprep.subr.mxu0 0.0
        %436 = vmatpush1.msra.mxu0 0.0
        %437 = vmatprep.subr.mxu0 0.0
        %438 = vmatpush1.msra.mxu0 0.0
        %439 = vmatprep.subr.mxu0 0.0
        %440 = vmatpush1.msra.mxu0 0.0
        %441 = vmatprep.subr.mxu0 0.0
        %442 = vmatpush1.msra.mxu0 0.0
        %443 = vmatprep.subr.mxu0 0.0
        %444 = vmatpush1.msra.mxu0 0.0
        %445 = vmatprep.subr.mxu0 0.0
        %446 = vmatpush1.msra.mxu0 0.0
        %447 = vmatprep.subr.mxu0 0.0
        %448 = vmatpush1.msra.mxu0 0.0
        %449 = vmatprep.subr.mxu0 0.0
        %450 = vmatpush1.msra.mxu0 0.0
        %451 = vmatprep.subr.mxu0 0.0
        %452 = vmatpush1.msra.mxu0 0.0
        %453 = vmatprep.subr.mxu0 0.0
        %454 = vmatpush1.msra.mxu0 0.0
        %455 = vmatprep.subr.mxu0 0.0
        %456 = vmatpush1.msra.mxu0 0.0
        %457 = vmatprep.mubr.f32.mxu0 0.0
        %458 = vmatmul.mubr.f32.gmra.mrb[0].mxu0 %v388
        %v459 = vpop.f32.mrb[0].mxu0
        %v460 = vadd.f32 0.0, %v459
        %v461 = vpop.f32.mrb[0].mxu0
        %v462 = vadd.f32 0.0, %v461
        %463 = vmatprep.mubr.f32.mxu0 0.0
        %464 = vmatmul.mubr.f32.gmra.mrb[0].mxu0 %v391
        %v465 = vpop.f32.mrb[0].mxu0
        %v466 = vadd.f32 0.0, %v465
        %v467 = vpop.f32.mrb[0].mxu0
        %v468 = vadd.f32 0.0, %v467
        %469 = vdwg.mxu0
        %v471 = vsel %vm386, %v368, 0
        %v474 = vsel %vm386, %v369, 0
        %476 = vmatprep.subr.mxu0 %v367
        %477 = vmatpush1.msra.mxu0 %v366
        %478 = vmatprep.subr.mxu0 0.0
        %479 = vmatpush1.msra.mxu0 0.0
        %480 = vmatprep.subr.mxu0 0.0
        %481 = vmatpush1.msra.mxu0 0.0
        %482 = vmatprep.subr.mxu0 0.0
        %483 = vmatpush1.msra.mxu0 0.0
        %484 = vmatprep.subr.mxu0 0.0
        %485 = vmatpush1.msra.mxu0 0.0
        %486 = vmatprep.subr.mxu0 0.0
        %487 = vmatpush1.msra.mxu0 0.0
        %488 = vmatprep.subr.mxu0 0.0
        %489 = vmatpush1.msra.mxu0 0.0
        %490 = vmatprep.subr.mxu0 0.0
        %491 = vmatpush1.msra.mxu0 0.0
        %492 = vmatprep.subr.mxu0 0.0
        %493 = vmatpush1.msra.mxu0 0.0
        %494 = vmatprep.subr.mxu0 0.0
        %495 = vmatpush1.msra.mxu0 0.0
        %496 = vmatprep.subr.mxu0 0.0
        %497 = vmatpush1.msra.mxu0 0.0
        %498 = vmatprep.subr.mxu0 0.0
        %499 = vmatpush1.msra.mxu0 0.0
        %500 = vmatprep.subr.mxu0 0.0
        %501 = vmatpush1.msra.mxu0 0.0
        %502 = vmatprep.subr.mxu0 0.0
        %503 = vmatpush1.msra.mxu0 0.0
        %504 = vmatprep.subr.mxu0 0.0
        %505 = vmatpush1.msra.mxu0 0.0
        %506 = vmatprep.subr.mxu0 0.0
        %507 = vmatpush1.msra.mxu0 0.0
        %508 = vmatprep.subr.mxu0 0.0
        %509 = vmatpush1.msra.mxu0 0.0
        %510 = vmatprep.subr.mxu0 0.0
        %511 = vmatpush1.msra.mxu0 0.0
        %512 = vmatprep.subr.mxu0 0.0
        %513 = vmatpush1.msra.mxu0 0.0
        %514 = vmatprep.subr.mxu0 0.0
        %515 = vmatpush1.msra.mxu0 0.0
        %516 = vmatprep.subr.mxu0 0.0
        %517 = vmatpush1.msra.mxu0 0.0
        %518 = vmatprep.subr.mxu0 0.0
        %519 = vmatpush1.msra.mxu0 0.0
        %520 = vmatprep.subr.mxu0 0.0
        %521 = vmatpush1.msra.mxu0 0.0
        %522 = vmatprep.subr.mxu0 0.0
        %523 = vmatpush1.msra.mxu0 0.0
        %524 = vmatprep.subr.mxu0 0.0
        %525 = vmatpush1.msra.mxu0 0.0
        %526 = vmatprep.subr.mxu0 0.0
        %527 = vmatpush1.msra.mxu0 0.0
        %528 = vmatprep.subr.mxu0 0.0
        %529 = vmatpush1.msra.mxu0 0.0
        %530 = vmatprep.subr.mxu0 0.0
        %531 = vmatpush1.msra.mxu0 0.0
        %532 = vmatprep.subr.mxu0 0.0
        %533 = vmatpush1.msra.mxu0 0.0
        %534 = vmatprep.subr.mxu0 0.0
        %535 = vmatpush1.msra.mxu0 0.0
        %536 = vmatprep.subr.mxu0 0.0
        %537 = vmatpush1.msra.mxu0 0.0
        %538 = vmatprep.subr.mxu0 0.0
        %539 = vmatpush1.msra.mxu0 0.0
        %540 = vmatprep.mubr.f32.mxu0 0.0
        %541 = vmatmul.mubr.f32.gmra.mrb[0].mxu0 %v471
        %v542 = vpop.f32.mrb[0].mxu0
        %v543 = vadd.f32 %v460, %v542
        %v544 = vpop.f32.mrb[0].mxu0
        %v545 = vadd.f32 %v462, %v544
        %546 = vmatprep.mubr.f32.mxu0 0.0
        %547 = vmatmul.mubr.f32.gmra.mrb[0].mxu0 %v474
        %v548 = vpop.f32.mrb[0].mxu0
        %v549 = vadd.f32 %v466, %v548
        %v550 = vpop.f32.mrb[0].mxu0
        %v551 = vadd.f32 %v468, %v550
        %552 = vdwg.mxu0
        %553 = vrot.lane.b32.xlu0 %v310, 15
        %v554 = vpop.permute.xlu0 %553
        %555 = vrot.lane.b32.xlu0 %v311, 15
        %v556 = vpop.permute.xlu0 %555
        %vm557 = vcmp.lt.s32.totalorder %v313, 15
        %v558 = vsel %vm557, %v554, %v556
        %v559 = vsel %vm557, %v556, %v554
        %v560 = vsel %vm347, 1, 0
        %v561 = vsel %vm348, 1, 0
        %vm562 = vcmp.eq.s32.totalorder %v560, 1
        %vm563 = vcmp.eq.s32.totalorder %v561, 1
        %v564 = vsel %vm562, %v559, 0.0
        %v565 = vsel %vm563, %v558, 0.0
        %s566 = scalar_lea.vmem %s2, 32
        %v567 = vld [vmem:[%s566] sm:$0xff]
        %v568 = vld [vmem:[%s566 + $0x8] sm:$0x7]
        %v570 = vsel %vm386, %v567, 0
        %v573 = vsel %vm386, %v568, 0
        %575 = vmatprep.subr.mxu0 %v565
        %576 = vmatpush1.msra.mxu0 %v564
        %577 = vmatprep.subr.mxu0 0.0
        %578 = vmatpush1.msra.mxu0 0.0
        %579 = vmatprep.subr.mxu0 0.0
        %580 = vmatpush1.msra.mxu0 0.0
        %581 = vmatprep.subr.mxu0 0.0
        %582 = vmatpush1.msra.mxu0 0.0
        %583 = vmatprep.subr.mxu0 0.0
        %584 = vmatpush1.msra.mxu0 0.0
        %585 = vmatprep.subr.mxu0 0.0
        %586 = vmatpush1.msra.mxu0 0.0
        %587 = vmatprep.subr.mxu0 0.0
        %588 = vmatpush1.msra.mxu0 0.0
        %589 = vmatprep.subr.mxu0 0.0
        %590 = vmatpush1.msra.mxu0 0.0
        %591 = vmatprep.subr.mxu0 0.0
        %592 = vmatpush1.msra.mxu0 0.0
        %593 = vmatprep.subr.mxu0 0.0
        %594 = vmatpush1.msra.mxu0 0.0
        %595 = vmatprep.subr.mxu0 0.0
        %596 = vmatpush1.msra.mxu0 0.0
        %597 = vmatprep.subr.mxu0 0.0
        %598 = vmatpush1.msra.mxu0 0.0
        %599 = vmatprep.subr.mxu0 0.0
        %600 = vmatpush1.msra.mxu0 0.0
        %601 = vmatprep.subr.mxu0 0.0
        %602 = vmatpush1.msra.mxu0 0.0
        %603 = vmatprep.subr.mxu0 0.0
        %604 = vmatpush1.msra.mxu0 0.0
        %605 = vmatprep.subr.mxu0 0.0
        %606 = vmatpush1.msra.mxu0 0.0
        %607 = vmatprep.subr.mxu0 0.0
        %608 = vmatpush1.msra.mxu0 0.0
        %609 = vmatprep.subr.mxu0 0.0
        %610 = vmatpush1.msra.mxu0 0.0
        %611 = vmatprep.subr.mxu0 0.0
        %612 = vmatpush1.msra.mxu0 0.0
        %613 = vmatprep.subr.mxu0 0.0
        %614 = vmatpush1.msra.mxu0 0.0
        %615 = vmatprep.subr.mxu0 0.0
        %616 = vmatpush1.msra.mxu0 0.0
        %617 = vmatprep.subr.mxu0 0.0
        %618 = vmatpush1.msra.mxu0 0.0
        %619 = vmatprep.subr.mxu0 0.0
        %620 = vmatpush1.msra.mxu0 0.0
        %621 = vmatprep.subr.mxu0 0.0
        %622 = vmatpush1.msra.mxu0 0.0
        %623 = vmatprep.subr.mxu0 0.0
        %624 = vmatpush1.msra.mxu0 0.0
        %625 = vmatprep.subr.mxu0 0.0
        %626 = vmatpush1.msra.mxu0 0.0
        %627 = vmatprep.subr.mxu0 0.0
        %628 = vmatpush1.msra.mxu0 0.0
        %629 = vmatprep.subr.mxu0 0.0
        %630 = vmatpush1.msra.mxu0 0.0
        %631 = vmatprep.subr.mxu0 0.0
        %632 = vmatpush1.msra.mxu0 0.0
        %633 = vmatprep.subr.mxu0 0.0
        %634 = vmatpush1.msra.mxu0 0.0
        %635 = vmatprep.subr.mxu0 0.0
        %636 = vmatpush1.msra.mxu0 0.0
        %637 = vmatprep.subr.mxu0 0.0
        %638 = vmatpush1.msra.mxu0 0.0
        %639 = vmatprep.mubr.f32.mxu0 0.0
        %640 = vmatmul.mubr.f32.gmra.mrb[0].mxu0 %v570
        %v641 = vpop.f32.mrb[0].mxu0
        %v642 = vadd.f32 0.0, %v641
        %v643 = vpop.f32.mrb[0].mxu0
        %v644 = vadd.f32 0.0, %v643
        %645 = vmatprep.mubr.f32.mxu0 0.0
        %646 = vmatmul.mubr.f32.gmra.mrb[0].mxu0 %v573
        %v647 = vpop.f32.mrb[0].mxu0
        %v648 = vadd.f32 0.0, %v647
        %v649 = vpop.f32.mrb[0].mxu0
        %v650 = vadd.f32 0.0, %v649
        %651 = vdwg.mxu0
        %v652 = vadd.f32 %v543, %v642
        %v653 = vadd.f32 %v545, %v644
        %v654 = vadd.f32 %v549, %v648
        %v655 = vadd.f32 %v551, %v650
        %656 = vrot.lane.b32.xlu0 %v310, 1
        %v657 = vpop.permute.xlu0 %656
        %658 = vrot.lane.b32.xlu0 %v311, 1
        %v659 = vpop.permute.xlu0 %658
        %vm660 = vcmp.lt.s32.totalorder %v313, 1
        %v661 = vsel %vm660, %v657, %v659
        %v662 = vsel %vm660, %v659, %v657
        %v663 = vsel %vm341, 1, 0
        %v664 = vsel %vm342, 1, 0
        %vm665 = vcmp.eq.s32.totalorder %v663, 1
        %vm666 = vcmp.eq.s32.totalorder %v664, 1
        %v667 = vsel %vm665, %v662, 0.0
        %v668 = vsel %vm666, %v661, 0.0
        %s669 = scalar_lea.vmem %s2, 48
        %v670 = vld [vmem:[%s669] sm:$0xff]
        %v671 = vld [vmem:[%s669 + $0x8] sm:$0x7]
        %v673 = vsel %vm386, %v670, 0
        %v676 = vsel %vm386, %v671, 0
        %678 = vmatprep.subr.mxu0 %v668
        %679 = vmatpush1.msra.mxu0 %v667
        %680 = vmatprep.subr.mxu0 0.0
        %681 = vmatpush1.msra.mxu0 0.0
        %682 = vmatprep.subr.mxu0 0.0
        %683 = vmatpush1.msra.mxu0 0.0
        %684 = vmatprep.subr.mxu0 0.0
        %685 = vmatpush1.msra.mxu0 0.0
        %686 = vmatprep.subr.mxu0 0.0
        %687 = vmatpush1.msra.mxu0 0.0
        %688 = vmatprep.subr.mxu0 0.0
        %689 = vmatpush1.msra.mxu0 0.0
        %690 = vmatprep.subr.mxu0 0.0
        %691 = vmatpush1.msra.mxu0 0.0
        %692 = vmatprep.subr.mxu0 0.0
        %693 = vmatpush1.msra.mxu0 0.0
        %694 = vmatprep.subr.mxu0 0.0
        %695 = vmatpush1.msra.mxu0 0.0
        %696 = vmatprep.subr.mxu0 0.0
        %697 = vmatpush1.msra.mxu0 0.0
        %698 = vmatprep.subr.mxu0 0.0
        %699 = vmatpush1.msra.mxu0 0.0
        %700 = vmatprep.subr.mxu0 0.0
        %701 = vmatpush1.msra.mxu0 0.0
        %702 = vmatprep.subr.mxu0 0.0
        %703 = vmatpush1.msra.mxu0 0.0
        %704 = vmatprep.subr.mxu0 0.0
        %705 = vmatpush1.msra.mxu0 0.0
        %706 = vmatprep.subr.mxu0 0.0
        %707 = vmatpush1.msra.mxu0 0.0
        %708 = vmatprep.subr.mxu0 0.0
        %709 = vmatpush1.msra.mxu0 0.0
        %710 = vmatprep.subr.mxu0 0.0
        %711 = vmatpush1.msra.mxu0 0.0
        %712 = vmatprep.subr.mxu0 0.0
        %713 = vmatpush1.msra.mxu0 0.0
        %714 = vmatprep.subr.mxu0 0.0
        %715 = vmatpush1.msra.mxu0 0.0
        %716 = vmatprep.subr.mxu0 0.0
        %717 = vmatpush1.msra.mxu0 0.0
        %718 = vmatprep.subr.mxu0 0.0
        %719 = vmatpush1.msra.mxu0 0.0
        %720 = vmatprep.subr.mxu0 0.0
        %721 = vmatpush1.msra.mxu0 0.0
        %722 = vmatprep.subr.mxu0 0.0
        %723 = vmatpush1.msra.mxu0 0.0
        %724 = vmatprep.subr.mxu0 0.0
        %725 = vmatpush1.msra.mxu0 0.0
        %726 = vmatprep.subr.mxu0 0.0
        %727 = vmatpush1.msra.mxu0 0.0
        %728 = vmatprep.subr.mxu0 0.0
        %729 = vmatpush1.msra.mxu0 0.0
        %730 = vmatprep.subr.mxu0 0.0
        %731 = vmatpush1.msra.mxu0 0.0
        %732 = vmatprep.subr.mxu0 0.0
        %733 = vmatpush1.msra.mxu0 0.0
        %734 = vmatprep.subr.mxu0 0.0
        %735 = vmatpush1.msra.mxu0 0.0
        %736 = vmatprep.subr.mxu0 0.0
        %737 = vmatpush1.msra.mxu0 0.0
        %738 = vmatprep.subr.mxu0 0.0
        %739 = vmatpush1.msra.mxu0 0.0
        %740 = vmatprep.subr.mxu0 0.0
        %741 = vmatpush1.msra.mxu0 0.0
        %742 = vmatprep.mubr.f32.mxu0 0.0
        %743 = vmatmul.mubr.f32.gmra.mrb[0].mxu0 %v673
        %v744 = vpop.f32.mrb[0].mxu0
        %v745 = vadd.f32 0.0, %v744
        %v746 = vpop.f32.mrb[0].mxu0
        %v747 = vadd.f32 0.0, %v746
        %748 = vmatprep.mubr.f32.mxu0 0.0
        %749 = vmatmul.mubr.f32.gmra.mrb[0].mxu0 %v676
        %v750 = vpop.f32.mrb[0].mxu0
        %v751 = vadd.f32 0.0, %v750
        %v752 = vpop.f32.mrb[0].mxu0
        %v753 = vadd.f32 0.0, %v752
        %754 = vdwg.mxu0
        %v755 = vadd.f32 %v652, %v745
        %v756 = vadd.f32 %v653, %v747
        %v757 = vadd.f32 %v654, %v751
        %v758 = vadd.f32 %v655, %v753
        %s759 = scalar_lea.vmem %s2, 64
        %v760 = vld [vmem:[%s759] sm:$0xff]
        %v761 = vld [vmem:[%s759 + $0x8] sm:$0x7]
        %v763 = vsel %vm386, %v760, 0
        %v766 = vsel %vm386, %v761, 0
        %768 = vmatprep.subr.mxu0 %v311
        %769 = vmatpush1.msra.mxu0 %v310
        %770 = vmatprep.subr.mxu0 0.0
        %771 = vmatpush1.msra.mxu0 0.0
        %772 = vmatprep.subr.mxu0 0.0
        %773 = vmatpush1.msra.mxu0 0.0
        %774 = vmatprep.subr.mxu0 0.0
        %775 = vmatpush1.msra.mxu0 0.0
        %776 = vmatprep.subr.mxu0 0.0
        %777 = vmatpush1.msra.mxu0 0.0
        %778 = vmatprep.subr.mxu0 0.0
        %779 = vmatpush1.msra.mxu0 0.0
        %780 = vmatprep.subr.mxu0 0.0
        %781 = vmatpush1.msra.mxu0 0.0
        %782 = vmatprep.subr.mxu0 0.0
        %783 = vmatpush1.msra.mxu0 0.0
        %784 = vmatprep.subr.mxu0 0.0
        %785 = vmatpush1.msra.mxu0 0.0
        %786 = vmatprep.subr.mxu0 0.0
        %787 = vmatpush1.msra.mxu0 0.0
        %788 = vmatprep.subr.mxu0 0.0
        %789 = vmatpush1.msra.mxu0 0.0
        %790 = vmatprep.subr.mxu0 0.0
        %791 = vmatpush1.msra.mxu0 0.0
        %792 = vmatprep.subr.mxu0 0.0
        %793 = vmatpush1.msra.mxu0 0.0
        %794 = vmatprep.subr.mxu0 0.0
        %795 = vmatpush1.msra.mxu0 0.0
        %796 = vmatprep.subr.mxu0 0.0
        %797 = vmatpush1.msra.mxu0 0.0
        %798 = vmatprep.subr.mxu0 0.0
        %799 = vmatpush1.msra.mxu0 0.0
        %800 = vmatprep.subr.mxu0 0.0
        %801 = vmatpush1.msra.mxu0 0.0
        %802 = vmatprep.subr.mxu0 0.0
        %803 = vmatpush1.msra.mxu0 0.0
        %804 = vmatprep.subr.mxu0 0.0
        %805 = vmatpush1.msra.mxu0 0.0
        %806 = vmatprep.subr.mxu0 0.0
        %807 = vmatpush1.msra.mxu0 0.0
        %808 = vmatprep.subr.mxu0 0.0
        %809 = vmatpush1.msra.mxu0 0.0
        %810 = vmatprep.subr.mxu0 0.0
        %811 = vmatpush1.msra.mxu0 0.0
        %812 = vmatprep.subr.mxu0 0.0
        %813 = vmatpush1.msra.mxu0 0.0
        %814 = vmatprep.subr.mxu0 0.0
        %815 = vmatpush1.msra.mxu0 0.0
        %816 = vmatprep.subr.mxu0 0.0
        %817 = vmatpush1.msra.mxu0 0.0
        %818 = vmatprep.subr.mxu0 0.0
        %819 = vmatpush1.msra.mxu0 0.0
        %820 = vmatprep.subr.mxu0 0.0
        %821 = vmatpush1.msra.mxu0 0.0
        %822 = vmatprep.subr.mxu0 0.0
        %823 = vmatpush1.msra.mxu0 0.0
        %824 = vmatprep.subr.mxu0 0.0
        %825 = vmatpush1.msra.mxu0 0.0
        %826 = vmatprep.subr.mxu0 0.0
        %827 = vmatpush1.msra.mxu0 0.0
        %828 = vmatprep.subr.mxu0 0.0
        %829 = vmatpush1.msra.mxu0 0.0
        %830 = vmatprep.subr.mxu0 0.0
        %831 = vmatpush1.msra.mxu0 0.0
        %832 = vmatprep.mubr.f32.mxu0 0.0
        %833 = vmatmul.mubr.f32.gmra.mrb[0].mxu0 %v763
        %v834 = vpop.f32.mrb[0].mxu0
        %v835 = vadd.f32 0.0, %v834
        %v836 = vpop.f32.mrb[0].mxu0
        %v837 = vadd.f32 0.0, %v836
        %838 = vmatprep.mubr.f32.mxu0 0.0
        %839 = vmatmul.mubr.f32.gmra.mrb[0].mxu0 %v766
        %v840 = vpop.f32.mrb[0].mxu0
        %v841 = vadd.f32 0.0, %v840
        %v842 = vpop.f32.mrb[0].mxu0
        %v843 = vadd.f32 0.0, %v842
        %844 = vdwg.mxu0
        %v845 = vadd.f32 %v755, %v835
        %v846 = vadd.f32 %v756, %v837
        %v847 = vadd.f32 %v757, %v841
        %v848 = vadd.f32 %v758, %v843
        %849 = vrot.lane.b32.xlu0 %v310, 127
        %v850 = vpop.permute.xlu0 %849
        %851 = vrot.lane.b32.xlu0 %v311, 127
        %v852 = vpop.permute.xlu0 %851
        %vm853 = vcmp.lt.s32.totalorder %v313, 127
        %v854 = vsel %vm853, %v850, %v852
        %v855 = vsel %vm853, %v852, %v850
        %v856 = vsel %vm345, 1, 0
        %v857 = vsel %vm346, 1, 0
        %vm858 = vcmp.eq.s32.totalorder %v856, 1
        %vm859 = vcmp.eq.s32.totalorder %v857, 1
        %v860 = vsel %vm858, %v854, 0.0
        %v861 = vsel %vm859, %v855, 0.0
        %s862 = scalar_lea.vmem %s2, 80
        %v863 = vld [vmem:[%s862] sm:$0xff]
        %v864 = vld [vmem:[%s862 + $0x8] sm:$0x7]
        %v866 = vsel %vm386, %v863, 0
        %v869 = vsel %vm386, %v864, 0
        %871 = vmatprep.subr.mxu0 %v861
        %872 = vmatpush1.msra.mxu0 %v860
        %873 = vmatprep.subr.mxu0 0.0
        %874 = vmatpush1.msra.mxu0 0.0
        %875 = vmatprep.subr.mxu0 0.0
        %876 = vmatpush1.msra.mxu0 0.0
        %877 = vmatprep.subr.mxu0 0.0
        %878 = vmatpush1.msra.mxu0 0.0
        %879 = vmatprep.subr.mxu0 0.0
        %880 = vmatpush1.msra.mxu0 0.0
        %881 = vmatprep.subr.mxu0 0.0
        %882 = vmatpush1.msra.mxu0 0.0
        %883 = vmatprep.subr.mxu0 0.0
        %884 = vmatpush1.msra.mxu0 0.0
        %885 = vmatprep.subr.mxu0 0.0
        %886 = vmatpush1.msra.mxu0 0.0
        %887 = vmatprep.subr.mxu0 0.0
        %888 = vmatpush1.msra.mxu0 0.0
        %889 = vmatprep.subr.mxu0 0.0
        %890 = vmatpush1.msra.mxu0 0.0
        %891 = vmatprep.subr.mxu0 0.0
        %892 = vmatpush1.msra.mxu0 0.0
        %893 = vmatprep.subr.mxu0 0.0
        %894 = vmatpush1.msra.mxu0 0.0
        %895 = vmatprep.subr.mxu0 0.0
        %896 = vmatpush1.msra.mxu0 0.0
        %897 = vmatprep.subr.mxu0 0.0
        %898 = vmatpush1.msra.mxu0 0.0
        %899 = vmatprep.subr.mxu0 0.0
        %900 = vmatpush1.msra.mxu0 0.0
        %901 = vmatprep.subr.mxu0 0.0
        %902 = vmatpush1.msra.mxu0 0.0
        %903 = vmatprep.subr.mxu0 0.0
        %904 = vmatpush1.msra.mxu0 0.0
        %905 = vmatprep.subr.mxu0 0.0
        %906 = vmatpush1.msra.mxu0 0.0
        %907 = vmatprep.subr.mxu0 0.0
        %908 = vmatpush1.msra.mxu0 0.0
        %909 = vmatprep.subr.mxu0 0.0
        %910 = vmatpush1.msra.mxu0 0.0
        %911 = vmatprep.subr.mxu0 0.0
        %912 = vmatpush1.msra.mxu0 0.0
        %913 = vmatprep.subr.mxu0 0.0
        %914 = vmatpush1.msra.mxu0 0.0
        %915 = vmatprep.subr.mxu0 0.0
        %916 = vmatpush1.msra.mxu0 0.0
        %917 = vmatprep.subr.mxu0 0.0
        %918 = vmatpush1.msra.mxu0 0.0
        %919 = vmatprep.subr.mxu0 0.0
        %920 = vmatpush1.msra.mxu0 0.0
        %921 = vmatprep.subr.mxu0 0.0
        %922 = vmatpush1.msra.mxu0 0.0
        %923 = vmatprep.subr.mxu0 0.0
        %924 = vmatpush1.msra.mxu0 0.0
        %925 = vmatprep.subr.mxu0 0.0
        %926 = vmatpush1.msra.mxu0 0.0
        %927 = vmatprep.subr.mxu0 0.0
        %928 = vmatpush1.msra.mxu0 0.0
        %929 = vmatprep.subr.mxu0 0.0
        %930 = vmatpush1.msra.mxu0 0.0
        %931 = vmatprep.subr.mxu0 0.0
        %932 = vmatpush1.msra.mxu0 0.0
        %933 = vmatprep.subr.mxu0 0.0
        %934 = vmatpush1.msra.mxu0 0.0
        %935 = vmatprep.mubr.f32.mxu0 0.0
        %936 = vmatmul.mubr.f32.gmra.mrb[0].mxu0 %v866
        %v937 = vpop.f32.mrb[0].mxu0
        %v938 = vadd.f32 0.0, %v937
        %v939 = vpop.f32.mrb[0].mxu0
        %v940 = vadd.f32 0.0, %v939
        %941 = vmatprep.mubr.f32.mxu0 0.0
        %942 = vmatmul.mubr.f32.gmra.mrb[0].mxu0 %v869
        %v943 = vpop.f32.mrb[0].mxu0
        %v944 = vadd.f32 0.0, %v943
        %v945 = vpop.f32.mrb[0].mxu0
        %v946 = vadd.f32 0.0, %v945
        %947 = vdwg.mxu0
        %v948 = vadd.f32 %v845, %v938
        %v949 = vadd.f32 %v846, %v940
        %v950 = vadd.f32 %v847, %v944
        %v951 = vadd.f32 %v848, %v946
        %952 = vrot.lane.b32.xlu0 %v310, 113
        %v953 = vpop.permute.xlu0 %952
        %954 = vrot.lane.b32.xlu0 %v311, 113
        %v955 = vpop.permute.xlu0 %954
        %vm956 = vcmp.lt.s32.totalorder %v313, 113
        %v957 = vsel %vm956, %v953, %v955
        %v958 = vsel %vm956, %v955, %v953
        %v959 = vsel %vm351, 1, 0
        %v960 = vsel %vm352, 1, 0
        %vm961 = vcmp.eq.s32.totalorder %v959, 1
        %vm962 = vcmp.eq.s32.totalorder %v960, 1
        %v963 = vsel %vm961, %v957, 0.0
        %v964 = vsel %vm962, %v958, 0.0
        %s965 = scalar_lea.vmem %s2, 96
        %v966 = vld [vmem:[%s965] sm:$0xff]
        %v967 = vld [vmem:[%s965 + $0x8] sm:$0x7]
        %v969 = vsel %vm386, %v966, 0
        %v972 = vsel %vm386, %v967, 0
        %974 = vmatprep.subr.mxu0 %v964
        %975 = vmatpush1.msra.mxu0 %v963
        %976 = vmatprep.subr.mxu0 0.0
        %977 = vmatpush1.msra.mxu0 0.0
        %978 = vmatprep.subr.mxu0 0.0
        %979 = vmatpush1.msra.mxu0 0.0
        %980 = vmatprep.subr.mxu0 0.0
        %981 = vmatpush1.msra.mxu0 0.0
        %982 = vmatprep.subr.mxu0 0.0
        %983 = vmatpush1.msra.mxu0 0.0
        %984 = vmatprep.subr.mxu0 0.0
        %985 = vmatpush1.msra.mxu0 0.0
        %986 = vmatprep.subr.mxu0 0.0
        %987 = vmatpush1.msra.mxu0 0.0
        %988 = vmatprep.subr.mxu0 0.0
        %989 = vmatpush1.msra.mxu0 0.0
        %990 = vmatprep.subr.mxu0 0.0
        %991 = vmatpush1.msra.mxu0 0.0
        %992 = vmatprep.subr.mxu0 0.0
        %993 = vmatpush1.msra.mxu0 0.0
        %994 = vmatprep.subr.mxu0 0.0
        %995 = vmatpush1.msra.mxu0 0.0
        %996 = vmatprep.subr.mxu0 0.0
        %997 = vmatpush1.msra.mxu0 0.0
        %998 = vmatprep.subr.mxu0 0.0
        %999 = vmatpush1.msra.mxu0 0.0
        %1000 = vmatprep.subr.mxu0 0.0
        %1001 = vmatpush1.msra.mxu0 0.0
        %1002 = vmatprep.subr.mxu0 0.0
        %1003 = vmatpush1.msra.mxu0 0.0
        %1004 = vmatprep.subr.mxu0 0.0
        %1005 = vmatpush1.msra.mxu0 0.0
        %1006 = vmatprep.subr.mxu0 0.0
        %1007 = vmatpush1.msra.mxu0 0.0
        %1008 = vmatprep.subr.mxu0 0.0
        %1009 = vmatpush1.msra.mxu0 0.0
        %1010 = vmatprep.subr.mxu0 0.0
        %1011 = vmatpush1.msra.mxu0 0.0
        %1012 = vmatprep.subr.mxu0 0.0
        %1013 = vmatpush1.msra.mxu0 0.0
        %1014 = vmatprep.subr.mxu0 0.0
        %1015 = vmatpush1.msra.mxu0 0.0
        %1016 = vmatprep.subr.mxu0 0.0
        %1017 = vmatpush1.msra.mxu0 0.0
        %1018 = vmatprep.subr.mxu0 0.0
        %1019 = vmatpush1.msra.mxu0 0.0
        %1020 = vmatprep.subr.mxu0 0.0
        %1021 = vmatpush1.msra.mxu0 0.0
        %1022 = vmatprep.subr.mxu0 0.0
        %1023 = vmatpush1.msra.mxu0 0.0
        %1024 = vmatprep.subr.mxu0 0.0
        %1025 = vmatpush1.msra.mxu0 0.0
        %1026 = vmatprep.subr.mxu0 0.0
        %1027 = vmatpush1.msra.mxu0 0.0
        %1028 = vmatprep.subr.mxu0 0.0
        %1029 = vmatpush1.msra.mxu0 0.0
        %1030 = vmatprep.subr.mxu0 0.0
        %1031 = vmatpush1.msra.mxu0 0.0
        %1032 = vmatprep.subr.mxu0 0.0
        %1033 = vmatpush1.msra.mxu0 0.0
        %1034 = vmatprep.subr.mxu0 0.0
        %1035 = vmatpush1.msra.mxu0 0.0
        %1036 = vmatprep.subr.mxu0 0.0
        %1037 = vmatpush1.msra.mxu0 0.0
        %1038 = vmatprep.mubr.f32.mxu0 0.0
        %1039 = vmatmul.mubr.f32.gmra.mrb[0].mxu0 %v969
        %v1040 = vpop.f32.mrb[0].mxu0
        %v1041 = vadd.f32 0.0, %v1040
        %v1042 = vpop.f32.mrb[0].mxu0
        %v1043 = vadd.f32 0.0, %v1042
        %1044 = vmatprep.mubr.f32.mxu0 0.0
        %1045 = vmatmul.mubr.f32.gmra.mrb[0].mxu0 %v972
        %v1046 = vpop.f32.mrb[0].mxu0
        %v1047 = vadd.f32 0.0, %v1046
        %v1048 = vpop.f32.mrb[0].mxu0
        %v1049 = vadd.f32 0.0, %v1048
        %1050 = vdwg.mxu0
        %v1051 = vadd.f32 %v948, %v1041
        %v1052 = vadd.f32 %v949, %v1043
        %v1053 = vadd.f32 %v950, %v1047
        %v1054 = vadd.f32 %v951, %v1049
        %1055 = vrot.lane.b32.xlu0 %v310, 112
        %v1056 = vpop.permute.xlu0 %1055
        %1057 = vrot.lane.b32.xlu0 %v311, 112
        %v1058 = vpop.permute.xlu0 %1057
        %vm1059 = vcmp.lt.s32.totalorder %v313, 112
        %v1060 = vsel %vm1059, %v1056, %v1058
        %v1061 = vsel %vm1059, %v1058, %v1056
        %v1062 = vsel %vm349, 1, 0
        %v1063 = vsel %vm350, 1, 0
        %vm1064 = vcmp.eq.s32.totalorder %v1062, 1
        %vm1065 = vcmp.eq.s32.totalorder %v1063, 1
        %v1066 = vsel %vm1064, %v1060, 0.0
        %v1067 = vsel %vm1065, %v1061, 0.0
        %s1068 = scalar_lea.vmem %s2, 112
        %v1069 = vld [vmem:[%s1068] sm:$0xff]
        %v1070 = vld [vmem:[%s1068 + $0x8] sm:$0x7]
        %v1072 = vsel %vm386, %v1069, 0
        %v1075 = vsel %vm386, %v1070, 0
        %1077 = vmatprep.subr.mxu0 %v1067
        %1078 = vmatpush1.msra.mxu0 %v1066
        %1079 = vmatprep.subr.mxu0 0.0
        %1080 = vmatpush1.msra.mxu0 0.0
        %1081 = vmatprep.subr.mxu0 0.0
        %1082 = vmatpush1.msra.mxu0 0.0
        %1083 = vmatprep.subr.mxu0 0.0
        %1084 = vmatpush1.msra.mxu0 0.0
        %1085 = vmatprep.subr.mxu0 0.0
        %1086 = vmatpush1.msra.mxu0 0.0
        %1087 = vmatprep.subr.mxu0 0.0
        %1088 = vmatpush1.msra.mxu0 0.0
        %1089 = vmatprep.subr.mxu0 0.0
        %1090 = vmatpush1.msra.mxu0 0.0
        %1091 = vmatprep.subr.mxu0 0.0
        %1092 = vmatpush1.msra.mxu0 0.0
        %1093 = vmatprep.subr.mxu0 0.0
        %1094 = vmatpush1.msra.mxu0 0.0
        %1095 = vmatprep.subr.mxu0 0.0
        %1096 = vmatpush1.msra.mxu0 0.0
        %1097 = vmatprep.subr.mxu0 0.0
        %1098 = vmatpush1.msra.mxu0 0.0
        %1099 = vmatprep.subr.mxu0 0.0
        %1100 = vmatpush1.msra.mxu0 0.0
        %1101 = vmatprep.subr.mxu0 0.0
        %1102 = vmatpush1.msra.mxu0 0.0
        %1103 = vmatprep.subr.mxu0 0.0
        %1104 = vmatpush1.msra.mxu0 0.0
        %1105 = vmatprep.subr.mxu0 0.0
        %1106 = vmatpush1.msra.mxu0 0.0
        %1107 = vmatprep.subr.mxu0 0.0
        %1108 = vmatpush1.msra.mxu0 0.0
        %1109 = vmatprep.subr.mxu0 0.0
        %1110 = vmatpush1.msra.mxu0 0.0
        %1111 = vmatprep.subr.mxu0 0.0
        %1112 = vmatpush1.msra.mxu0 0.0
        %1113 = vmatprep.subr.mxu0 0.0
        %1114 = vmatpush1.msra.mxu0 0.0
        %1115 = vmatprep.subr.mxu0 0.0
        %1116 = vmatpush1.msra.mxu0 0.0
        %1117 = vmatprep.subr.mxu0 0.0
        %1118 = vmatpush1.msra.mxu0 0.0
        %1119 = vmatprep.subr.mxu0 0.0
        %1120 = vmatpush1.msra.mxu0 0.0
        %1121 = vmatprep.subr.mxu0 0.0
        %1122 = vmatpush1.msra.mxu0 0.0
        %1123 = vmatprep.subr.mxu0 0.0
        %1124 = vmatpush1.msra.mxu0 0.0
        %1125 = vmatprep.subr.mxu0 0.0
        %1126 = vmatpush1.msra.mxu0 0.0
        %1127 = vmatprep.subr.mxu0 0.0
        %1128 = vmatpush1.msra.mxu0 0.0
        %1129 = vmatprep.subr.mxu0 0.0
        %1130 = vmatpush1.msra.mxu0 0.0
        %1131 = vmatprep.subr.mxu0 0.0
        %1132 = vmatpush1.msra.mxu0 0.0
        %1133 = vmatprep.subr.mxu0 0.0
        %1134 = vmatpush1.msra.mxu0 0.0
        %1135 = vmatprep.subr.mxu0 0.0
        %1136 = vmatpush1.msra.mxu0 0.0
        %1137 = vmatprep.subr.mxu0 0.0
        %1138 = vmatpush1.msra.mxu0 0.0
        %1139 = vmatprep.subr.mxu0 0.0
        %1140 = vmatpush1.msra.mxu0 0.0
        %1141 = vmatprep.mubr.f32.mxu0 0.0
        %1142 = vmatmul.mubr.f32.gmra.mrb[0].mxu0 %v1072
        %v1143 = vpop.f32.mrb[0].mxu0
        %v1144 = vadd.f32 0.0, %v1143
        %v1145 = vpop.f32.mrb[0].mxu0
        %v1146 = vadd.f32 0.0, %v1145
        %1147 = vmatprep.mubr.f32.mxu0 0.0
        %1148 = vmatmul.mubr.f32.gmra.mrb[0].mxu0 %v1075
        %v1149 = vpop.f32.mrb[0].mxu0
        %v1150 = vadd.f32 0.0, %v1149
        %v1151 = vpop.f32.mrb[0].mxu0
        %v1152 = vadd.f32 0.0, %v1151
        %1153 = vdwg.mxu0
        %v1154 = vadd.f32 %v1051, %v1144
        %v1155 = vadd.f32 %v1052, %v1146
        %v1156 = vadd.f32 %v1053, %v1150
        %v1157 = vadd.f32 %v1054, %v1152
        %1158 = vrot.lane.b32.xlu0 %v310, 111
        %v1159 = vpop.permute.xlu0 %1158
        %1160 = vrot.lane.b32.xlu0 %v311, 111
        %v1161 = vpop.permute.xlu0 %1160
        %vm1162 = vcmp.lt.s32.totalorder %v313, 111
        %v1163 = vsel %vm1162, %v1159, %v1161
        %v1164 = vsel %vm1162, %v1161, %v1159
        %v1165 = vsel %vm353, 1, 0
        %v1166 = vsel %vm354, 1, 0
        %vm1167 = vcmp.eq.s32.totalorder %v1165, 1
        %vm1168 = vcmp.eq.s32.totalorder %v1166, 1
        %v1169 = vsel %vm1167, %v1163, 0.0
        %v1170 = vsel %vm1168, %v1164, 0.0
        %s1171 = scalar_lea.vmem %s2, 128
        %v1172 = vld [vmem:[%s1171] sm:$0xff]
        %v1173 = vld [vmem:[%s1171 + $0x8] sm:$0x7]
        %v1175 = vsel %vm386, %v1172, 0
        %v1178 = vsel %vm386, %v1173, 0
        %1180 = vmatprep.subr.mxu0 %v1170
        %1181 = vmatpush1.msra.mxu0 %v1169
        %1182 = vmatprep.subr.mxu0 0.0
        %1183 = vmatpush1.msra.mxu0 0.0
        %1184 = vmatprep.subr.mxu0 0.0
        %1185 = vmatpush1.msra.mxu0 0.0
        %1186 = vmatprep.subr.mxu0 0.0
        %1187 = vmatpush1.msra.mxu0 0.0
        %1188 = vmatprep.subr.mxu0 0.0
        %1189 = vmatpush1.msra.mxu0 0.0
        %1190 = vmatprep.subr.mxu0 0.0
        %1191 = vmatpush1.msra.mxu0 0.0
        %1192 = vmatprep.subr.mxu0 0.0
        %1193 = vmatpush1.msra.mxu0 0.0
        %1194 = vmatprep.subr.mxu0 0.0
        %1195 = vmatpush1.msra.mxu0 0.0
        %1196 = vmatprep.subr.mxu0 0.0
        %1197 = vmatpush1.msra.mxu0 0.0
        %1198 = vmatprep.subr.mxu0 0.0
        %1199 = vmatpush1.msra.mxu0 0.0
        %1200 = vmatprep.subr.mxu0 0.0
        %1201 = vmatpush1.msra.mxu0 0.0
        %1202 = vmatprep.subr.mxu0 0.0
        %1203 = vmatpush1.msra.mxu0 0.0
        %1204 = vmatprep.subr.mxu0 0.0
        %1205 = vmatpush1.msra.mxu0 0.0
        %1206 = vmatprep.subr.mxu0 0.0
        %1207 = vmatpush1.msra.mxu0 0.0
        %1208 = vmatprep.subr.mxu0 0.0
        %1209 = vmatpush1.msra.mxu0 0.0
        %1210 = vmatprep.subr.mxu0 0.0
        %1211 = vmatpush1.msra.mxu0 0.0
        %1212 = vmatprep.subr.mxu0 0.0
        %1213 = vmatpush1.msra.mxu0 0.0
        %1214 = vmatprep.subr.mxu0 0.0
        %1215 = vmatpush1.msra.mxu0 0.0
        %1216 = vmatprep.subr.mxu0 0.0
        %1217 = vmatpush1.msra.mxu0 0.0
        %1218 = vmatprep.subr.mxu0 0.0
        %1219 = vmatpush1.msra.mxu0 0.0
        %1220 = vmatprep.subr.mxu0 0.0
        %1221 = vmatpush1.msra.mxu0 0.0
        %1222 = vmatprep.subr.mxu0 0.0
        %1223 = vmatpush1.msra.mxu0 0.0
        %1224 = vmatprep.subr.mxu0 0.0
        %1225 = vmatpush1.msra.mxu0 0.0
        %1226 = vmatprep.subr.mxu0 0.0
        %1227 = vmatpush1.msra.mxu0 0.0
        %1228 = vmatprep.subr.mxu0 0.0
        %1229 = vmatpush1.msra.mxu0 0.0
        %1230 = vmatprep.subr.mxu0 0.0
        %1231 = vmatpush1.msra.mxu0 0.0
        %1232 = vmatprep.subr.mxu0 0.0
        %1233 = vmatpush1.msra.mxu0 0.0
        %1234 = vmatprep.subr.mxu0 0.0
        %1235 = vmatpush1.msra.mxu0 0.0
        %1236 = vmatprep.subr.mxu0 0.0
        %1237 = vmatpush1.msra.mxu0 0.0
        %1238 = vmatprep.subr.mxu0 0.0
        %1239 = vmatpush1.msra.mxu0 0.0
        %1240 = vmatprep.subr.mxu0 0.0
        %1241 = vmatpush1.msra.mxu0 0.0
        %1242 = vmatprep.subr.mxu0 0.0
        %1243 = vmatpush1.msra.mxu0 0.0
        %1244 = vmatprep.mubr.f32.mxu0 0.0
        %1245 = vmatmul.mubr.f32.gmra.mrb[0].mxu0 %v1175
        %v1246 = vpop.f32.mrb[0].mxu0
        %v1247 = vadd.f32 0.0, %v1246
        %v1248 = vpop.f32.mrb[0].mxu0
        %v1249 = vadd.f32 0.0, %v1248
        %1250 = vmatprep.mubr.f32.mxu0 0.0
        %1251 = vmatmul.mubr.f32.gmra.mrb[0].mxu0 %v1178
        %v1252 = vpop.f32.mrb[0].mxu0
        %v1253 = vadd.f32 0.0, %v1252
        %v1254 = vpop.f32.mrb[0].mxu0
        %v1255 = vadd.f32 0.0, %v1254
        %1256 = vdwg.mxu0
        %v1257 = vadd.f32 %v1154, %v1247
        %v1258 = vadd.f32 %v1155, %v1249
        %v1259 = vadd.f32 %v1156, %v1253
        %v1260 = vadd.f32 %v1157, %v1255
        %v1261 = vld [vmem:[%s3] sm:$0xff]
        %v1262 = vld [vmem:[%s3 + $0x8] sm:$0x7]
        %1264 = vset.pattern.permute.xlu0 0
        %1265 = vperm.xlu0 %1264, %v1261
        %v1266 = vpop.permute.xlu0 %1265
        %1269 = vset.pattern.permute.xlu0 0
        %1270 = vperm.xlu0 %1269, %v1262
        %v1271 = vpop.permute.xlu0 %1270
        %v1273 = vadd.f32 %v1257, %v1266
        %v1274 = vadd.f32 %v1258, %v1266
        %v1275 = vadd.f32 %v1259, %v1271
        %v1276 = vadd.f32 %v1260, %v1271
        %v1277 = vld [vmem:[%s304] sm:$0x77]
        %v1279 = vcombine.high %v1277, %v1277
        %v1281 = vadd.f32 %v1275, %v1277
        %v1282 = vadd.f32 %v1276, %v1279
        %v1285 = vcombine.low %v1281, %v1282
        %1287 = vst [vmem:[%s309] sm:$0x77] %v1285
        %1288 = vrot.lane.b32.xlu0 %v1281, 17
        %v1289 = vpop.permute.xlu0 %1288
        %1290 = vrot.lane.b32.xlu0 %v1282, 17
        %v1291 = vpop.permute.xlu0 %1290
        %v1292 = vsel %vm359, %v1289, %v1291
        %v1293 = vsel %vm359, %v1291, %v1289
        %v1294 = vsel %vm364, %v1293, 0.0
        %v1295 = vsel %vm365, %v1292, 0.0
        %v1296 = vld [vmem:[%s4] sm:$0xff]
        %1297 = vrot.lane.b32.xlu0 %v1281, 16
        %v1298 = vpop.permute.xlu0 %1297
        %1299 = vrot.lane.b32.xlu0 %v1282, 16
        %v1300 = vpop.permute.xlu0 %1299
        %v1301 = vsel %vm374, %v1298, %v1300
        %v1302 = vsel %vm374, %v1300, %v1298
        %v1303 = vsel %vm379, %v1302, 0.0
        %v1304 = vsel %vm380, %v1301, 0.0
        %s1305 = scalar_lea.vmem %s4, 8
        %v1306 = vld [vmem:[%s1305] sm:$0xff]
        %vm1307 = vcmask 23552
        %v1309 = vsel %vm1307, %v1306, 0
        %vm1311 = vcmask 1042432
        %v1313 = vsel %vm1311, %v1303, 0
        %v1316 = vsel %vm1311, %v1304, 0
        %1318 = vmatprep.subr.mxu0 %v1316
        %1319 = vmatpush1.msra.mxu0 %v1313
        %1320 = vmatprep.subr.mxu0 0.0
        %1321 = vmatpush1.msra.mxu0 0.0
        %1322 = vmatprep.subr.mxu0 0.0
        %1323 = vmatpush1.msra.mxu0 0.0
        %1324 = vmatprep.subr.mxu0 0.0
        %1325 = vmatpush1.msra.mxu0 0.0
        %1326 = vmatprep.subr.mxu0 0.0
        %1327 = vmatpush1.msra.mxu0 0.0
        %1328 = vmatprep.subr.mxu0 0.0
        %1329 = vmatpush1.msra.mxu0 0.0
        %1330 = vmatprep.subr.mxu0 0.0
        %1331 = vmatpush1.msra.mxu0 0.0
        %1332 = vmatprep.subr.mxu0 0.0
        %1333 = vmatpush1.msra.mxu0 0.0
        %1334 = vmatprep.subr.mxu0 0.0
        %1335 = vmatpush1.msra.mxu0 0.0
        %1336 = vmatprep.subr.mxu0 0.0
        %1337 = vmatpush1.msra.mxu0 0.0
        %1338 = vmatprep.subr.mxu0 0.0
        %1339 = vmatpush1.msra.mxu0 0.0
        %1340 = vmatprep.subr.mxu0 0.0
        %1341 = vmatpush1.msra.mxu0 0.0
        %1342 = vmatprep.subr.mxu0 0.0
        %1343 = vmatpush1.msra.mxu0 0.0
        %1344 = vmatprep.subr.mxu0 0.0
        %1345 = vmatpush1.msra.mxu0 0.0
        %1346 = vmatprep.subr.mxu0 0.0
        %1347 = vmatpush1.msra.mxu0 0.0
        %1348 = vmatprep.subr.mxu0 0.0
        %1349 = vmatpush1.msra.mxu0 0.0
        %1350 = vmatprep.subr.mxu0 0.0
        %1351 = vmatpush1.msra.mxu0 0.0
        %1352 = vmatprep.subr.mxu0 0.0
        %1353 = vmatpush1.msra.mxu0 0.0
        %1354 = vmatprep.subr.mxu0 0.0
        %1355 = vmatpush1.msra.mxu0 0.0
        %1356 = vmatprep.subr.mxu0 0.0
        %1357 = vmatpush1.msra.mxu0 0.0
        %1358 = vmatprep.subr.mxu0 0.0
        %1359 = vmatpush1.msra.mxu0 0.0
        %1360 = vmatprep.subr.mxu0 0.0
        %1361 = vmatpush1.msra.mxu0 0.0
        %1362 = vmatprep.subr.mxu0 0.0
        %1363 = vmatpush1.msra.mxu0 0.0
        %1364 = vmatprep.subr.mxu0 0.0
        %1365 = vmatpush1.msra.mxu0 0.0
        %1366 = vmatprep.subr.mxu0 0.0
        %1367 = vmatpush1.msra.mxu0 0.0
        %1368 = vmatprep.subr.mxu0 0.0
        %1369 = vmatpush1.msra.mxu0 0.0
        %1370 = vmatprep.subr.mxu0 0.0
        %1371 = vmatpush1.msra.mxu0 0.0
        %1372 = vmatprep.subr.mxu0 0.0
        %1373 = vmatpush1.msra.mxu0 0.0
        %1374 = vmatprep.subr.mxu0 0.0
        %1375 = vmatpush1.msra.mxu0 0.0
        %1376 = vmatprep.subr.mxu0 0.0
        %1377 = vmatpush1.msra.mxu0 0.0
        %1378 = vmatprep.subr.mxu0 0.0
        %1379 = vmatpush1.msra.mxu0 0.0
        %1380 = vmatprep.subr.mxu0 0.0
        %1381 = vmatpush1.msra.mxu0 0.0
        %1382 = vmatprep.mubr.f32.mxu0 0.0
        %1383 = vmatmul.mubr.f32.gmra.mrb[0].mxu0 %v1309
        %v1384 = vpop.f32.mrb[0].mxu0
        %v1385 = vadd.f32 0.0, %v1384
        %v1386 = vpop.f32.mrb[0].mxu0
        %v1387 = vadd.f32 0.0, %v1386
        %1388 = vdwg.mxu0
        %v1390 = vsel %vm1307, %v1296, 0
        %v1393 = vsel %vm1311, %v1294, 0
        %v1396 = vsel %vm1311, %v1295, 0
        %1398 = vmatprep.subr.mxu0 %v1396
        %1399 = vmatpush1.msra.mxu0 %v1393
        %1400 = vmatprep.subr.mxu0 0.0
        %1401 = vmatpush1.msra.mxu0 0.0
        %1402 = vmatprep.subr.mxu0 0.0
        %1403 = vmatpush1.msra.mxu0 0.0
        %1404 = vmatprep.subr.mxu0 0.0
        %1405 = vmatpush1.msra.mxu0 0.0
        %1406 = vmatprep.subr.mxu0 0.0
        %1407 = vmatpush1.msra.mxu0 0.0
        %1408 = vmatprep.subr.mxu0 0.0
        %1409 = vmatpush1.msra.mxu0 0.0
        %1410 = vmatprep.subr.mxu0 0.0
        %1411 = vmatpush1.msra.mxu0 0.0
        %1412 = vmatprep.subr.mxu0 0.0
        %1413 = vmatpush1.msra.mxu0 0.0
        %1414 = vmatprep.subr.mxu0 0.0
        %1415 = vmatpush1.msra.mxu0 0.0
        %1416 = vmatprep.subr.mxu0 0.0
        %1417 = vmatpush1.msra.mxu0 0.0
        %1418 = vmatprep.subr.mxu0 0.0
        %1419 = vmatpush1.msra.mxu0 0.0
        %1420 = vmatprep.subr.mxu0 0.0
        %1421 = vmatpush1.msra.mxu0 0.0
        %1422 = vmatprep.subr.mxu0 0.0
        %1423 = vmatpush1.msra.mxu0 0.0
        %1424 = vmatprep.subr.mxu0 0.0
        %1425 = vmatpush1.msra.mxu0 0.0
        %1426 = vmatprep.subr.mxu0 0.0
        %1427 = vmatpush1.msra.mxu0 0.0
        %1428 = vmatprep.subr.mxu0 0.0
        %1429 = vmatpush1.msra.mxu0 0.0
        %1430 = vmatprep.subr.mxu0 0.0
        %1431 = vmatpush1.msra.mxu0 0.0
        %1432 = vmatprep.subr.mxu0 0.0
        %1433 = vmatpush1.msra.mxu0 0.0
        %1434 = vmatprep.subr.mxu0 0.0
        %1435 = vmatpush1.msra.mxu0 0.0
        %1436 = vmatprep.subr.mxu0 0.0
        %1437 = vmatpush1.msra.mxu0 0.0
        %1438 = vmatprep.subr.mxu0 0.0
        %1439 = vmatpush1.msra.mxu0 0.0
        %1440 = vmatprep.subr.mxu0 0.0
        %1441 = vmatpush1.msra.mxu0 0.0
        %1442 = vmatprep.subr.mxu0 0.0
        %1443 = vmatpush1.msra.mxu0 0.0
        %1444 = vmatprep.subr.mxu0 0.0
        %1445 = vmatpush1.msra.mxu0 0.0
        %1446 = vmatprep.subr.mxu0 0.0
        %1447 = vmatpush1.msra.mxu0 0.0
        %1448 = vmatprep.subr.mxu0 0.0
        %1449 = vmatpush1.msra.mxu0 0.0
        %1450 = vmatprep.subr.mxu0 0.0
        %1451 = vmatpush1.msra.mxu0 0.0
        %1452 = vmatprep.subr.mxu0 0.0
        %1453 = vmatpush1.msra.mxu0 0.0
        %1454 = vmatprep.subr.mxu0 0.0
        %1455 = vmatpush1.msra.mxu0 0.0
        %1456 = vmatprep.subr.mxu0 0.0
        %1457 = vmatpush1.msra.mxu0 0.0
        %1458 = vmatprep.subr.mxu0 0.0
        %1459 = vmatpush1.msra.mxu0 0.0
        %1460 = vmatprep.subr.mxu0 0.0
        %1461 = vmatpush1.msra.mxu0 0.0
        %1462 = vmatprep.mubr.f32.mxu0 0.0
        %1463 = vmatmul.mubr.f32.gmra.mrb[0].mxu0 %v1390
        %v1464 = vpop.f32.mrb[0].mxu0
        %v1465 = vadd.f32 %v1385, %v1464
        %v1466 = vpop.f32.mrb[0].mxu0
        %v1467 = vadd.f32 %v1387, %v1466
        %1468 = vdwg.mxu0
        %1469 = vrot.lane.b32.xlu0 %v1281, 15
        %v1470 = vpop.permute.xlu0 %1469
        %1471 = vrot.lane.b32.xlu0 %v1282, 15
        %v1472 = vpop.permute.xlu0 %1471
        %v1473 = vsel %vm557, %v1470, %v1472
        %v1474 = vsel %vm557, %v1472, %v1470
        %v1475 = vsel %vm562, %v1474, 0.0
        %v1476 = vsel %vm563, %v1473, 0.0
        %s1477 = scalar_lea.vmem %s4, 16
        %v1478 = vld [vmem:[%s1477] sm:$0xff]
        %v1480 = vsel %vm1307, %v1478, 0
        %v1483 = vsel %vm1311, %v1475, 0
        %v1486 = vsel %vm1311, %v1476, 0
        %1488 = vmatprep.subr.mxu0 %v1486
        %1489 = vmatpush1.msra.mxu0 %v1483
        %1490 = vmatprep.subr.mxu0 0.0
        %1491 = vmatpush1.msra.mxu0 0.0
        %1492 = vmatprep.subr.mxu0 0.0
        %1493 = vmatpush1.msra.mxu0 0.0
        %1494 = vmatprep.subr.mxu0 0.0
        %1495 = vmatpush1.msra.mxu0 0.0
        %1496 = vmatprep.subr.mxu0 0.0
        %1497 = vmatpush1.msra.mxu0 0.0
        %1498 = vmatprep.subr.mxu0 0.0
        %1499 = vmatpush1.msra.mxu0 0.0
        %1500 = vmatprep.subr.mxu0 0.0
        %1501 = vmatpush1.msra.mxu0 0.0
        %1502 = vmatprep.subr.mxu0 0.0
        %1503 = vmatpush1.msra.mxu0 0.0
        %1504 = vmatprep.subr.mxu0 0.0
        %1505 = vmatpush1.msra.mxu0 0.0
        %1506 = vmatprep.subr.mxu0 0.0
        %1507 = vmatpush1.msra.mxu0 0.0
        %1508 = vmatprep.subr.mxu0 0.0
        %1509 = vmatpush1.msra.mxu0 0.0
        %1510 = vmatprep.subr.mxu0 0.0
        %1511 = vmatpush1.msra.mxu0 0.0
        %1512 = vmatprep.subr.mxu0 0.0
        %1513 = vmatpush1.msra.mxu0 0.0
        %1514 = vmatprep.subr.mxu0 0.0
        %1515 = vmatpush1.msra.mxu0 0.0
        %1516 = vmatprep.subr.mxu0 0.0
        %1517 = vmatpush1.msra.mxu0 0.0
        %1518 = vmatprep.subr.mxu0 0.0
        %1519 = vmatpush1.msra.mxu0 0.0
        %1520 = vmatprep.subr.mxu0 0.0
        %1521 = vmatpush1.msra.mxu0 0.0
        %1522 = vmatprep.subr.mxu0 0.0
        %1523 = vmatpush1.msra.mxu0 0.0
        %1524 = vmatprep.subr.mxu0 0.0
        %1525 = vmatpush1.msra.mxu0 0.0
        %1526 = vmatprep.subr.mxu0 0.0
        %1527 = vmatpush1.msra.mxu0 0.0
        %1528 = vmatprep.subr.mxu0 0.0
        %1529 = vmatpush1.msra.mxu0 0.0
        %1530 = vmatprep.subr.mxu0 0.0
        %1531 = vmatpush1.msra.mxu0 0.0
        %1532 = vmatprep.subr.mxu0 0.0
        %1533 = vmatpush1.msra.mxu0 0.0
        %1534 = vmatprep.subr.mxu0 0.0
        %1535 = vmatpush1.msra.mxu0 0.0
        %1536 = vmatprep.subr.mxu0 0.0
        %1537 = vmatpush1.msra.mxu0 0.0
        %1538 = vmatprep.subr.mxu0 0.0
        %1539 = vmatpush1.msra.mxu0 0.0
        %1540 = vmatprep.subr.mxu0 0.0
        %1541 = vmatpush1.msra.mxu0 0.0
        %1542 = vmatprep.subr.mxu0 0.0
        %1543 = vmatpush1.msra.mxu0 0.0
        %1544 = vmatprep.subr.mxu0 0.0
        %1545 = vmatpush1.msra.mxu0 0.0
        %1546 = vmatprep.subr.mxu0 0.0
        %1547 = vmatpush1.msra.mxu0 0.0
        %1548 = vmatprep.subr.mxu0 0.0
        %1549 = vmatpush1.msra.mxu0 0.0
        %1550 = vmatprep.subr.mxu0 0.0
        %1551 = vmatpush1.msra.mxu0 0.0
        %1552 = vmatprep.mubr.f32.mxu0 0.0
        %1553 = vmatmul.mubr.f32.gmra.mrb[0].mxu0 %v1480
        %v1554 = vpop.f32.mrb[0].mxu0
        %v1555 = vadd.f32 0.0, %v1554
        %v1556 = vpop.f32.mrb[0].mxu0
        %v1557 = vadd.f32 0.0, %v1556
        %1558 = vdwg.mxu0
        %v1559 = vadd.f32 %v1465, %v1555
        %v1560 = vadd.f32 %v1467, %v1557
        %1561 = vrot.lane.b32.xlu0 %v1281, 1
        %v1562 = vpop.permute.xlu0 %1561
        %1563 = vrot.lane.b32.xlu0 %v1282, 1
        %v1564 = vpop.permute.xlu0 %1563
        %v1565 = vsel %vm660, %v1562, %v1564
        %v1566 = vsel %vm660, %v1564, %v1562
        %v1567 = vsel %vm665, %v1566, 0.0
        %v1568 = vsel %vm666, %v1565, 0.0
        %s1569 = scalar_lea.vmem %s4, 24
        %v1570 = vld [vmem:[%s1569] sm:$0xff]
        %v1572 = vsel %vm1307, %v1570, 0
        %v1575 = vsel %vm1311, %v1567, 0
        %v1578 = vsel %vm1311, %v1568, 0
        %1580 = vmatprep.subr.mxu0 %v1578
        %1581 = vmatpush1.msra.mxu0 %v1575
        %1582 = vmatprep.subr.mxu0 0.0
        %1583 = vmatpush1.msra.mxu0 0.0
        %1584 = vmatprep.subr.mxu0 0.0
        %1585 = vmatpush1.msra.mxu0 0.0
        %1586 = vmatprep.subr.mxu0 0.0
        %1587 = vmatpush1.msra.mxu0 0.0
        %1588 = vmatprep.subr.mxu0 0.0
        %1589 = vmatpush1.msra.mxu0 0.0
        %1590 = vmatprep.subr.mxu0 0.0
        %1591 = vmatpush1.msra.mxu0 0.0
        %1592 = vmatprep.subr.mxu0 0.0
        %1593 = vmatpush1.msra.mxu0 0.0
        %1594 = vmatprep.subr.mxu0 0.0
        %1595 = vmatpush1.msra.mxu0 0.0
        %1596 = vmatprep.subr.mxu0 0.0
        %1597 = vmatpush1.msra.mxu0 0.0
        %1598 = vmatprep.subr.mxu0 0.0
        %1599 = vmatpush1.msra.mxu0 0.0
        %1600 = vmatprep.subr.mxu0 0.0
        %1601 = vmatpush1.msra.mxu0 0.0
        %1602 = vmatprep.subr.mxu0 0.0
        %1603 = vmatpush1.msra.mxu0 0.0
        %1604 = vmatprep.subr.mxu0 0.0
        %1605 = vmatpush1.msra.mxu0 0.0
        %1606 = vmatprep.subr.mxu0 0.0
        %1607 = vmatpush1.msra.mxu0 0.0
        %1608 = vmatprep.subr.mxu0 0.0
        %1609 = vmatpush1.msra.mxu0 0.0
        %1610 = vmatprep.subr.mxu0 0.0
        %1611 = vmatpush1.msra.mxu0 0.0
        %1612 = vmatprep.subr.mxu0 0.0
        %1613 = vmatpush1.msra.mxu0 0.0
        %1614 = vmatprep.subr.mxu0 0.0
        %1615 = vmatpush1.msra.mxu0 0.0
        %1616 = vmatprep.subr.mxu0 0.0
        %1617 = vmatpush1.msra.mxu0 0.0
        %1618 = vmatprep.subr.mxu0 0.0
        %1619 = vmatpush1.msra.mxu0 0.0
        %1620 = vmatprep.subr.mxu0 0.0
        %1621 = vmatpush1.msra.mxu0 0.0
        %1622 = vmatprep.subr.mxu0 0.0
        %1623 = vmatpush1.msra.mxu0 0.0
        %1624 = vmatprep.subr.mxu0 0.0
        %1625 = vmatpush1.msra.mxu0 0.0
        %1626 = vmatprep.subr.mxu0 0.0
        %1627 = vmatpush1.msra.mxu0 0.0
        %1628 = vmatprep.subr.mxu0 0.0
        %1629 = vmatpush1.msra.mxu0 0.0
        %1630 = vmatprep.subr.mxu0 0.0
        %1631 = vmatpush1.msra.mxu0 0.0
        %1632 = vmatprep.subr.mxu0 0.0
        %1633 = vmatpush1.msra.mxu0 0.0
        %1634 = vmatprep.subr.mxu0 0.0
        %1635 = vmatpush1.msra.mxu0 0.0
        %1636 = vmatprep.subr.mxu0 0.0
        %1637 = vmatpush1.msra.mxu0 0.0
        %1638 = vmatprep.subr.mxu0 0.0
        %1639 = vmatpush1.msra.mxu0 0.0
        %1640 = vmatprep.subr.mxu0 0.0
        %1641 = vmatpush1.msra.mxu0 0.0
        %1642 = vmatprep.subr.mxu0 0.0
        %1643 = vmatpush1.msra.mxu0 0.0
        %1644 = vmatprep.mubr.f32.mxu0 0.0
        %1645 = vmatmul.mubr.f32.gmra.mrb[0].mxu0 %v1572
        %v1646 = vpop.f32.mrb[0].mxu0
        %v1647 = vadd.f32 0.0, %v1646
        %v1648 = vpop.f32.mrb[0].mxu0
        %v1649 = vadd.f32 0.0, %v1648
        %1650 = vdwg.mxu0
        %v1651 = vadd.f32 %v1559, %v1647
        %v1652 = vadd.f32 %v1560, %v1649
        %s1653 = scalar_lea.vmem %s4, 32
        %v1654 = vld [vmem:[%s1653] sm:$0xff]
        %v1656 = vsel %vm1307, %v1654, 0
        %v1658 = vsel %vm1311, %v1281, 0
        %v1660 = vsel %vm1311, %v1282, 0
        %1662 = vmatprep.subr.mxu0 %v1660
        %1663 = vmatpush1.msra.mxu0 %v1658
        %1664 = vmatprep.subr.mxu0 0.0
        %1665 = vmatpush1.msra.mxu0 0.0
        %1666 = vmatprep.subr.mxu0 0.0
        %1667 = vmatpush1.msra.mxu0 0.0
        %1668 = vmatprep.subr.mxu0 0.0
        %1669 = vmatpush1.msra.mxu0 0.0
        %1670 = vmatprep.subr.mxu0 0.0
        %1671 = vmatpush1.msra.mxu0 0.0
        %1672 = vmatprep.subr.mxu0 0.0
        %1673 = vmatpush1.msra.mxu0 0.0
        %1674 = vmatprep.subr.mxu0 0.0
        %1675 = vmatpush1.msra.mxu0 0.0
        %1676 = vmatprep.subr.mxu0 0.0
        %1677 = vmatpush1.msra.mxu0 0.0
        %1678 = vmatprep.subr.mxu0 0.0
        %1679 = vmatpush1.msra.mxu0 0.0
        %1680 = vmatprep.subr.mxu0 0.0
        %1681 = vmatpush1.msra.mxu0 0.0
        %1682 = vmatprep.subr.mxu0 0.0
        %1683 = vmatpush1.msra.mxu0 0.0
        %1684 = vmatprep.subr.mxu0 0.0
        %1685 = vmatpush1.msra.mxu0 0.0
        %1686 = vmatprep.subr.mxu0 0.0
        %1687 = vmatpush1.msra.mxu0 0.0
        %1688 = vmatprep.subr.mxu0 0.0
        %1689 = vmatpush1.msra.mxu0 0.0
        %1690 = vmatprep.subr.mxu0 0.0
        %1691 = vmatpush1.msra.mxu0 0.0
        %1692 = vmatprep.subr.mxu0 0.0
        %1693 = vmatpush1.msra.mxu0 0.0
        %1694 = vmatprep.subr.mxu0 0.0
        %1695 = vmatpush1.msra.mxu0 0.0
        %1696 = vmatprep.subr.mxu0 0.0
        %1697 = vmatpush1.msra.mxu0 0.0
        %1698 = vmatprep.subr.mxu0 0.0
        %1699 = vmatpush1.msra.mxu0 0.0
        %1700 = vmatprep.subr.mxu0 0.0
        %1701 = vmatpush1.msra.mxu0 0.0
        %1702 = vmatprep.subr.mxu0 0.0
        %1703 = vmatpush1.msra.mxu0 0.0
        %1704 = vmatprep.subr.mxu0 0.0
        %1705 = vmatpush1.msra.mxu0 0.0
        %1706 = vmatprep.subr.mxu0 0.0
        %1707 = vmatpush1.msra.mxu0 0.0
        %1708 = vmatprep.subr.mxu0 0.0
        %1709 = vmatpush1.msra.mxu0 0.0
        %1710 = vmatprep.subr.mxu0 0.0
        %1711 = vmatpush1.msra.mxu0 0.0
        %1712 = vmatprep.subr.mxu0 0.0
        %1713 = vmatpush1.msra.mxu0 0.0
        %1714 = vmatprep.subr.mxu0 0.0
        %1715 = vmatpush1.msra.mxu0 0.0
        %1716 = vmatprep.subr.mxu0 0.0
        %1717 = vmatpush1.msra.mxu0 0.0
        %1718 = vmatprep.subr.mxu0 0.0
        %1719 = vmatpush1.msra.mxu0 0.0
        %1720 = vmatprep.subr.mxu0 0.0
        %1721 = vmatpush1.msra.mxu0 0.0
        %1722 = vmatprep.subr.mxu0 0.0
        %1723 = vmatpush1.msra.mxu0 0.0
        %1724 = vmatprep.subr.mxu0 0.0
        %1725 = vmatpush1.msra.mxu0 0.0
        %1726 = vmatprep.mubr.f32.mxu0 0.0
        %1727 = vmatmul.mubr.f32.gmra.mrb[0].mxu0 %v1656
        %v1728 = vpop.f32.mrb[0].mxu0
        %v1729 = vadd.f32 0.0, %v1728
        %v1730 = vpop.f32.mrb[0].mxu0
        %v1731 = vadd.f32 0.0, %v1730
        %1732 = vdwg.mxu0
        %v1733 = vadd.f32 %v1651, %v1729
        %v1734 = vadd.f32 %v1652, %v1731
        %1735 = vrot.lane.b32.xlu0 %v1281, 127
        %v1736 = vpop.permute.xlu0 %1735
        %1737 = vrot.lane.b32.xlu0 %v1282, 127
        %v1738 = vpop.permute.xlu0 %1737
        %v1739 = vsel %vm853, %v1736, %v1738
        %v1740 = vsel %vm853, %v1738, %v1736
        %v1741 = vsel %vm858, %v1739, 0.0
        %v1742 = vsel %vm859, %v1740, 0.0
        %s1743 = scalar_lea.vmem %s4, 40
        %v1744 = vld [vmem:[%s1743] sm:$0xff]
        %v1746 = vsel %vm1307, %v1744, 0
        %v1749 = vsel %vm1311, %v1741, 0
        %v1752 = vsel %vm1311, %v1742, 0
        %1754 = vmatprep.subr.mxu0 %v1752
        %1755 = vmatpush1.msra.mxu0 %v1749
        %1756 = vmatprep.subr.mxu0 0.0
        %1757 = vmatpush1.msra.mxu0 0.0
        %1758 = vmatprep.subr.mxu0 0.0
        %1759 = vmatpush1.msra.mxu0 0.0
        %1760 = vmatprep.subr.mxu0 0.0
        %1761 = vmatpush1.msra.mxu0 0.0
        %1762 = vmatprep.subr.mxu0 0.0
        %1763 = vmatpush1.msra.mxu0 0.0
        %1764 = vmatprep.subr.mxu0 0.0
        %1765 = vmatpush1.msra.mxu0 0.0
        %1766 = vmatprep.subr.mxu0 0.0
        %1767 = vmatpush1.msra.mxu0 0.0
        %1768 = vmatprep.subr.mxu0 0.0
        %1769 = vmatpush1.msra.mxu0 0.0
        %1770 = vmatprep.subr.mxu0 0.0
        %1771 = vmatpush1.msra.mxu0 0.0
        %1772 = vmatprep.subr.mxu0 0.0
        %1773 = vmatpush1.msra.mxu0 0.0
        %1774 = vmatprep.subr.mxu0 0.0
        %1775 = vmatpush1.msra.mxu0 0.0
        %1776 = vmatprep.subr.mxu0 0.0
        %1777 = vmatpush1.msra.mxu0 0.0
        %1778 = vmatprep.subr.mxu0 0.0
        %1779 = vmatpush1.msra.mxu0 0.0
        %1780 = vmatprep.subr.mxu0 0.0
        %1781 = vmatpush1.msra.mxu0 0.0
        %1782 = vmatprep.subr.mxu0 0.0
        %1783 = vmatpush1.msra.mxu0 0.0
        %1784 = vmatprep.subr.mxu0 0.0
        %1785 = vmatpush1.msra.mxu0 0.0
        %1786 = vmatprep.subr.mxu0 0.0
        %1787 = vmatpush1.msra.mxu0 0.0
        %1788 = vmatprep.subr.mxu0 0.0
        %1789 = vmatpush1.msra.mxu0 0.0
        %1790 = vmatprep.subr.mxu0 0.0
        %1791 = vmatpush1.msra.mxu0 0.0
        %1792 = vmatprep.subr.mxu0 0.0
        %1793 = vmatpush1.msra.mxu0 0.0
        %1794 = vmatprep.subr.mxu0 0.0
        %1795 = vmatpush1.msra.mxu0 0.0
        %1796 = vmatprep.subr.mxu0 0.0
        %1797 = vmatpush1.msra.mxu0 0.0
        %1798 = vmatprep.subr.mxu0 0.0
        %1799 = vmatpush1.msra.mxu0 0.0
        %1800 = vmatprep.subr.mxu0 0.0
        %1801 = vmatpush1.msra.mxu0 0.0
        %1802 = vmatprep.subr.mxu0 0.0
        %1803 = vmatpush1.msra.mxu0 0.0
        %1804 = vmatprep.subr.mxu0 0.0
        %1805 = vmatpush1.msra.mxu0 0.0
        %1806 = vmatprep.subr.mxu0 0.0
        %1807 = vmatpush1.msra.mxu0 0.0
        %1808 = vmatprep.subr.mxu0 0.0
        %1809 = vmatpush1.msra.mxu0 0.0
        %1810 = vmatprep.subr.mxu0 0.0
        %1811 = vmatpush1.msra.mxu0 0.0
        %1812 = vmatprep.subr.mxu0 0.0
        %1813 = vmatpush1.msra.mxu0 0.0
        %1814 = vmatprep.subr.mxu0 0.0
        %1815 = vmatpush1.msra.mxu0 0.0
        %1816 = vmatprep.subr.mxu0 0.0
        %1817 = vmatpush1.msra.mxu0 0.0
        %1818 = vmatprep.mubr.f32.mxu0 0.0
        %1819 = vmatmul.mubr.f32.gmra.mrb[0].mxu0 %v1746
        %v1820 = vpop.f32.mrb[0].mxu0
        %v1821 = vadd.f32 0.0, %v1820
        %v1822 = vpop.f32.mrb[0].mxu0
        %v1823 = vadd.f32 0.0, %v1822
        %1824 = vdwg.mxu0
        %v1825 = vadd.f32 %v1733, %v1821
        %v1826 = vadd.f32 %v1734, %v1823
        %1827 = vrot.lane.b32.xlu0 %v1281, 113
        %v1828 = vpop.permute.xlu0 %1827
        %1829 = vrot.lane.b32.xlu0 %v1282, 113
        %v1830 = vpop.permute.xlu0 %1829
        %v1831 = vsel %vm956, %v1828, %v1830
        %v1832 = vsel %vm956, %v1830, %v1828
        %v1833 = vsel %vm961, %v1831, 0.0
        %v1834 = vsel %vm962, %v1832, 0.0
        %s1835 = scalar_lea.vmem %s4, 48
        %v1836 = vld [vmem:[%s1835] sm:$0xff]
        %v1838 = vsel %vm1307, %v1836, 0
        %v1841 = vsel %vm1311, %v1833, 0
        %v1844 = vsel %vm1311, %v1834, 0
        %1846 = vmatprep.subr.mxu0 %v1844
        %1847 = vmatpush1.msra.mxu0 %v1841
        %1848 = vmatprep.subr.mxu0 0.0
        %1849 = vmatpush1.msra.mxu0 0.0
        %1850 = vmatprep.subr.mxu0 0.0
        %1851 = vmatpush1.msra.mxu0 0.0
        %1852 = vmatprep.subr.mxu0 0.0
        %1853 = vmatpush1.msra.mxu0 0.0
        %1854 = vmatprep.subr.mxu0 0.0
        %1855 = vmatpush1.msra.mxu0 0.0
        %1856 = vmatprep.subr.mxu0 0.0
        %1857 = vmatpush1.msra.mxu0 0.0
        %1858 = vmatprep.subr.mxu0 0.0
        %1859 = vmatpush1.msra.mxu0 0.0
        %1860 = vmatprep.subr.mxu0 0.0
        %1861 = vmatpush1.msra.mxu0 0.0
        %1862 = vmatprep.subr.mxu0 0.0
        %1863 = vmatpush1.msra.mxu0 0.0
        %1864 = vmatprep.subr.mxu0 0.0
        %1865 = vmatpush1.msra.mxu0 0.0
        %1866 = vmatprep.subr.mxu0 0.0
        %1867 = vmatpush1.msra.mxu0 0.0
        %1868 = vmatprep.subr.mxu0 0.0
        %1869 = vmatpush1.msra.mxu0 0.0
        %1870 = vmatprep.subr.mxu0 0.0
        %1871 = vmatpush1.msra.mxu0 0.0
        %1872 = vmatprep.subr.mxu0 0.0
        %1873 = vmatpush1.msra.mxu0 0.0
        %1874 = vmatprep.subr.mxu0 0.0
        %1875 = vmatpush1.msra.mxu0 0.0
        %1876 = vmatprep.subr.mxu0 0.0
        %1877 = vmatpush1.msra.mxu0 0.0
        %1878 = vmatprep.subr.mxu0 0.0
        %1879 = vmatpush1.msra.mxu0 0.0
        %1880 = vmatprep.subr.mxu0 0.0
        %1881 = vmatpush1.msra.mxu0 0.0
        %1882 = vmatprep.subr.mxu0 0.0
        %1883 = vmatpush1.msra.mxu0 0.0
        %1884 = vmatprep.subr.mxu0 0.0
        %1885 = vmatpush1.msra.mxu0 0.0
        %1886 = vmatprep.subr.mxu0 0.0
        %1887 = vmatpush1.msra.mxu0 0.0
        %1888 = vmatprep.subr.mxu0 0.0
        %1889 = vmatpush1.msra.mxu0 0.0
        %1890 = vmatprep.subr.mxu0 0.0
        %1891 = vmatpush1.msra.mxu0 0.0
        %1892 = vmatprep.subr.mxu0 0.0
        %1893 = vmatpush1.msra.mxu0 0.0
        %1894 = vmatprep.subr.mxu0 0.0
        %1895 = vmatpush1.msra.mxu0 0.0
        %1896 = vmatprep.subr.mxu0 0.0
        %1897 = vmatpush1.msra.mxu0 0.0
        %1898 = vmatprep.subr.mxu0 0.0
        %1899 = vmatpush1.msra.mxu0 0.0
        %1900 = vmatprep.subr.mxu0 0.0
        %1901 = vmatpush1.msra.mxu0 0.0
        %1902 = vmatprep.subr.mxu0 0.0
        %1903 = vmatpush1.msra.mxu0 0.0
        %1904 = vmatprep.subr.mxu0 0.0
        %1905 = vmatpush1.msra.mxu0 0.0
        %1906 = vmatprep.subr.mxu0 0.0
        %1907 = vmatpush1.msra.mxu0 0.0
        %1908 = vmatprep.subr.mxu0 0.0
        %1909 = vmatpush1.msra.mxu0 0.0
        %1910 = vmatprep.mubr.f32.mxu0 0.0
        %1911 = vmatmul.mubr.f32.gmra.mrb[0].mxu0 %v1838
        %v1912 = vpop.f32.mrb[0].mxu0
        %v1913 = vadd.f32 0.0, %v1912
        %v1914 = vpop.f32.mrb[0].mxu0
        %v1915 = vadd.f32 0.0, %v1914
        %1916 = vdwg.mxu0
        %v1917 = vadd.f32 %v1825, %v1913
        %v1918 = vadd.f32 %v1826, %v1915
        %1919 = vrot.lane.b32.xlu0 %v1281, 112
        %v1920 = vpop.permute.xlu0 %1919
        %1921 = vrot.lane.b32.xlu0 %v1282, 112
        %v1922 = vpop.permute.xlu0 %1921
        %v1923 = vsel %vm1059, %v1920, %v1922
        %v1924 = vsel %vm1059, %v1922, %v1920
        %v1925 = vsel %vm1064, %v1923, 0.0
        %v1926 = vsel %vm1065, %v1924, 0.0
        %s1927 = scalar_lea.vmem %s4, 56
        %v1928 = vld [vmem:[%s1927] sm:$0xff]
        %v1930 = vsel %vm1307, %v1928, 0
        %v1933 = vsel %vm1311, %v1925, 0
        %v1936 = vsel %vm1311, %v1926, 0
        %1938 = vmatprep.subr.mxu0 %v1936
        %1939 = vmatpush1.msra.mxu0 %v1933
        %1940 = vmatprep.subr.mxu0 0.0
        %1941 = vmatpush1.msra.mxu0 0.0
        %1942 = vmatprep.subr.mxu0 0.0
        %1943 = vmatpush1.msra.mxu0 0.0
        %1944 = vmatprep.subr.mxu0 0.0
        %1945 = vmatpush1.msra.mxu0 0.0
        %1946 = vmatprep.subr.mxu0 0.0
        %1947 = vmatpush1.msra.mxu0 0.0
        %1948 = vmatprep.subr.mxu0 0.0
        %1949 = vmatpush1.msra.mxu0 0.0
        %1950 = vmatprep.subr.mxu0 0.0
        %1951 = vmatpush1.msra.mxu0 0.0
        %1952 = vmatprep.subr.mxu0 0.0
        %1953 = vmatpush1.msra.mxu0 0.0
        %1954 = vmatprep.subr.mxu0 0.0
        %1955 = vmatpush1.msra.mxu0 0.0
        %1956 = vmatprep.subr.mxu0 0.0
        %1957 = vmatpush1.msra.mxu0 0.0
        %1958 = vmatprep.subr.mxu0 0.0
        %1959 = vmatpush1.msra.mxu0 0.0
        %1960 = vmatprep.subr.mxu0 0.0
        %1961 = vmatpush1.msra.mxu0 0.0
        %1962 = vmatprep.subr.mxu0 0.0
        %1963 = vmatpush1.msra.mxu0 0.0
        %1964 = vmatprep.subr.mxu0 0.0
        %1965 = vmatpush1.msra.mxu0 0.0
        %1966 = vmatprep.subr.mxu0 0.0
        %1967 = vmatpush1.msra.mxu0 0.0
        %1968 = vmatprep.subr.mxu0 0.0
        %1969 = vmatpush1.msra.mxu0 0.0
        %1970 = vmatprep.subr.mxu0 0.0
        %1971 = vmatpush1.msra.mxu0 0.0
        %1972 = vmatprep.subr.mxu0 0.0
        %1973 = vmatpush1.msra.mxu0 0.0
        %1974 = vmatprep.subr.mxu0 0.0
        %1975 = vmatpush1.msra.mxu0 0.0
        %1976 = vmatprep.subr.mxu0 0.0
        %1977 = vmatpush1.msra.mxu0 0.0
        %1978 = vmatprep.subr.mxu0 0.0
        %1979 = vmatpush1.msra.mxu0 0.0
        %1980 = vmatprep.subr.mxu0 0.0
        %1981 = vmatpush1.msra.mxu0 0.0
        %1982 = vmatprep.subr.mxu0 0.0
        %1983 = vmatpush1.msra.mxu0 0.0
        %1984 = vmatprep.subr.mxu0 0.0
        %1985 = vmatpush1.msra.mxu0 0.0
        %1986 = vmatprep.subr.mxu0 0.0
        %1987 = vmatpush1.msra.mxu0 0.0
        %1988 = vmatprep.subr.mxu0 0.0
        %1989 = vmatpush1.msra.mxu0 0.0
        %1990 = vmatprep.subr.mxu0 0.0
        %1991 = vmatpush1.msra.mxu0 0.0
        %1992 = vmatprep.subr.mxu0 0.0
        %1993 = vmatpush1.msra.mxu0 0.0
        %1994 = vmatprep.subr.mxu0 0.0
        %1995 = vmatpush1.msra.mxu0 0.0
        %1996 = vmatprep.subr.mxu0 0.0
        %1997 = vmatpush1.msra.mxu0 0.0
        %1998 = vmatprep.subr.mxu0 0.0
        %1999 = vmatpush1.msra.mxu0 0.0
        %2000 = vmatprep.subr.mxu0 0.0
        %2001 = vmatpush1.msra.mxu0 0.0
        %2002 = vmatprep.mubr.f32.mxu0 0.0
        %2003 = vmatmul.mubr.f32.gmra.mrb[0].mxu0 %v1930
        %v2004 = vpop.f32.mrb[0].mxu0
        %v2005 = vadd.f32 0.0, %v2004
        %v2006 = vpop.f32.mrb[0].mxu0
        %v2007 = vadd.f32 0.0, %v2006
        %2008 = vdwg.mxu0
        %v2009 = vadd.f32 %v1917, %v2005
        %v2010 = vadd.f32 %v1918, %v2007
        %2011 = vrot.lane.b32.xlu0 %v1281, 111
        %v2012 = vpop.permute.xlu0 %2011
        %2013 = vrot.lane.b32.xlu0 %v1282, 111
        %v2014 = vpop.permute.xlu0 %2013
        %v2015 = vsel %vm1162, %v2012, %v2014
        %v2016 = vsel %vm1162, %v2014, %v2012
        %v2017 = vsel %vm1167, %v2015, 0.0
        %v2018 = vsel %vm1168, %v2016, 0.0
        %s2019 = scalar_lea.vmem %s4, 64
        %v2020 = vld [vmem:[%s2019] sm:$0xff]
        %v2022 = vsel %vm1307, %v2020, 0
        %v2025 = vsel %vm1311, %v2017, 0
        %v2028 = vsel %vm1311, %v2018, 0
        %2030 = vmatprep.subr.mxu0 %v2028
        %2031 = vmatpush1.msra.mxu0 %v2025
        %2032 = vmatprep.subr.mxu0 0.0
        %2033 = vmatpush1.msra.mxu0 0.0
        %2034 = vmatprep.subr.mxu0 0.0
        %2035 = vmatpush1.msra.mxu0 0.0
        %2036 = vmatprep.subr.mxu0 0.0
        %2037 = vmatpush1.msra.mxu0 0.0
        %2038 = vmatprep.subr.mxu0 0.0
        %2039 = vmatpush1.msra.mxu0 0.0
        %2040 = vmatprep.subr.mxu0 0.0
        %2041 = vmatpush1.msra.mxu0 0.0
        %2042 = vmatprep.subr.mxu0 0.0
        %2043 = vmatpush1.msra.mxu0 0.0
        %2044 = vmatprep.subr.mxu0 0.0
        %2045 = vmatpush1.msra.mxu0 0.0
        %2046 = vmatprep.subr.mxu0 0.0
        %2047 = vmatpush1.msra.mxu0 0.0
        %2048 = vmatprep.subr.mxu0 0.0
        %2049 = vmatpush1.msra.mxu0 0.0
        %2050 = vmatprep.subr.mxu0 0.0
        %2051 = vmatpush1.msra.mxu0 0.0
        %2052 = vmatprep.subr.mxu0 0.0
        %2053 = vmatpush1.msra.mxu0 0.0
        %2054 = vmatprep.subr.mxu0 0.0
        %2055 = vmatpush1.msra.mxu0 0.0
        %2056 = vmatprep.subr.mxu0 0.0
        %2057 = vmatpush1.msra.mxu0 0.0
        %2058 = vmatprep.subr.mxu0 0.0
        %2059 = vmatpush1.msra.mxu0 0.0
        %2060 = vmatprep.subr.mxu0 0.0
        %2061 = vmatpush1.msra.mxu0 0.0
        %2062 = vmatprep.subr.mxu0 0.0
        %2063 = vmatpush1.msra.mxu0 0.0
        %2064 = vmatprep.subr.mxu0 0.0
        %2065 = vmatpush1.msra.mxu0 0.0
        %2066 = vmatprep.subr.mxu0 0.0
        %2067 = vmatpush1.msra.mxu0 0.0
        %2068 = vmatprep.subr.mxu0 0.0
        %2069 = vmatpush1.msra.mxu0 0.0
        %2070 = vmatprep.subr.mxu0 0.0
        %2071 = vmatpush1.msra.mxu0 0.0
        %2072 = vmatprep.subr.mxu0 0.0
        %2073 = vmatpush1.msra.mxu0 0.0
        %2074 = vmatprep.subr.mxu0 0.0
        %2075 = vmatpush1.msra.mxu0 0.0
        %2076 = vmatprep.subr.mxu0 0.0
        %2077 = vmatpush1.msra.mxu0 0.0
        %2078 = vmatprep.subr.mxu0 0.0
        %2079 = vmatpush1.msra.mxu0 0.0
        %2080 = vmatprep.subr.mxu0 0.0
        %2081 = vmatpush1.msra.mxu0 0.0
        %2082 = vmatprep.subr.mxu0 0.0
        %2083 = vmatpush1.msra.mxu0 0.0
        %2084 = vmatprep.subr.mxu0 0.0
        %2085 = vmatpush1.msra.mxu0 0.0
        %2086 = vmatprep.subr.mxu0 0.0
        %2087 = vmatpush1.msra.mxu0 0.0
        %2088 = vmatprep.subr.mxu0 0.0
        %2089 = vmatpush1.msra.mxu0 0.0
        %2090 = vmatprep.subr.mxu0 0.0
        %2091 = vmatpush1.msra.mxu0 0.0
        %2092 = vmatprep.subr.mxu0 0.0
        %2093 = vmatpush1.msra.mxu0 0.0
        %2094 = vmatprep.mubr.f32.mxu0 0.0
        %2095 = vmatmul.mubr.f32.gmra.mrb[0].mxu0 %v2022
        %v2096 = vpop.f32.mrb[0].mxu0
        %v2097 = vadd.f32 0.0, %v2096
        %v2098 = vpop.f32.mrb[0].mxu0
        %v2099 = vadd.f32 0.0, %v2098
        %2100 = vdwg.mxu0
        %v2101 = vadd.f32 %v2009, %v2097
        %v2102 = vadd.f32 %v2010, %v2099
        %v2103 = vld [vmem:[%s5] sm:$0xff]
        %2105 = vset.pattern.permute.xlu0 0
        %2106 = vperm.xlu0 %2105, %v2103
        %v2107 = vpop.permute.xlu0 %2106
        %v2109 = vadd.f32 %v2101, %v2107
        %v2110 = vadd.f32 %v2102, %v2107
        %v2111 = vxor.u32 %v2109, 2147483648
        %v2112 = vxor.u32 %v2110, 2147483648
        %v2113 = vmul.f32 %v2111, 1.442695
        %v2114 = vpow.pop %v2113
        %v2115 = vmul.f32 %v2112, 1.442695
        %v2116 = vpow.pop %v2115
        %v2117 = vadd.f32 %v2114, 1.0
        %v2118 = vadd.f32 %v2116, 1.0
        %v2119 = vrcp.pop %v2117
        %v2120 = vmul.f32 1.0, %v2119
        %v2121 = vrcp.pop %v2118
        %v2122 = vmul.f32 1.0, %v2121
        %v2123 = vmul.f32 %v1273, %v2120
        %v2124 = vmul.f32 %v1274, %v2122
        %v2125 = vadd.f32 %v2123, %v310
        %v2126 = vadd.f32 %v2124, %v311
        %2127 = vst [vmem:[%s287] sm:$0xff] %v2125
        %2128 = vst [vmem:[%s287 + $0x8] sm:$0xff] %v2126
        %s2129 = sand.u32 %s166, 1
        %s2130 = scalar_lea.sflag [#allocation3], %s2129
        %s2131 = sand.u32 %s166, 1
        %s2132 = smul.addr %s2131, 16
        %s2133 = scalar_lea.vmem [#allocation2], %s2132
        %p2134 = scmp.lt.s32.totalorder %s22, 1
        %s2135 = scalar_select %p2134, %s22, 1
        %s2136 = smul.addr %s2135, 2
        %s2137 = smul.addr %s2136, 4
        %s2138 = scalar_lea.vmem %s7, %s2137
        // Predicated region
        $region45: #{tpu_custom_call.1} parent=43 // pred_check
          %p2139 = pneg %p176
        $region46: #{tpu_custom_call.1} parent=43 // pred_check_branch
          %2141 = sbr.rel (%p2139) target = $region48
        $region47: #{tpu_custom_call.1} parent=43 // pred_region
          %s2143 = ssub.s32 256, 256
          %2144 = vsyncadd %s2130, %s2143
          %s2145 = smul.addr %s22, 2
          %s2146 = smul.addr %s2145, 128
          %s2147 = scalar_lea.hbm %s6, %s2146
          %s2149 = sshll.u32 %s2133, 4
          %s2150 = int_to_ptr.vmem [resolvable:$true] %s2149
          %2152 = dma.vmem_to_hbm [thread:$0]  %s2150, 256, %s2147, %s2130
        $region48: #{tpu_custom_call.1} parent=43 // pred_fallthru
          _
        // Predicated region
        $region49: #{tpu_custom_call.1} parent=43 // pred_check
          %p2153 = pneg %p202
        $region50: #{tpu_custom_call.1} parent=43 // pred_check_branch
          %2155 = sbr.rel (%p2153) target = $region52
        $region51: #{tpu_custom_call.1} parent=43 // pred_region
          _
        $region52: #{tpu_custom_call.1} parent=43 // pred_fallthru
          _
      $region44: #{tpu_custom_call.1} parent=5 // pred_fallthru
        _
      %p2156 = scmp.le.s32.totalorder 2, %s17
      // Predicated region
      $region53: #{tpu_custom_call.1} parent=5 // pred_check
        %p2157 = pneg %p2156
      $region54: #{tpu_custom_call.1} parent=5 // pred_check_branch
        %2159 = sbr.rel (%p2157) target = $region56
      $region55: #{tpu_custom_call.1} parent=5 // pred_region
        %s2160 = ssub.s32 %s17, 2
        // Predicated region
        $region57: #{tpu_custom_call.1} parent=55 // pred_check
          %p2161 = pneg %p182
        $region58: #{tpu_custom_call.1} parent=55 // pred_check_branch
          %2163 = sbr.rel (%p2161) target = $region60
        $region59: #{tpu_custom_call.1} parent=55 // pred_region
          %s2164 = sand.u32 %s167, 1
          %s2165 = scalar_lea.sflag [#allocation3], %s2164
          %s2166 = sand.u32 %s167, 1
          %s2167 = smul.addr %s2166, 16
          %s2168 = scalar_lea.vmem [#allocation2], %s2167
          %2169 = dma.done %s2165, 256
        $region60: #{tpu_custom_call.1} parent=55 // pred_fallthru
          _
        // Predicated region
        $region61: #{tpu_custom_call.1} parent=55 // pred_check
          %p2170 = pneg %p208
        $region62: #{tpu_custom_call.1} parent=55 // pred_check_branch
          %2172 = sbr.rel (%p2170) target = $region64
        $region63: #{tpu_custom_call.1} parent=55 // pred_region
          %p2173 = scmp.lt.s32.totalorder %s23, 1
          %s2174 = scalar_select %p2173, %s23, 1
          %s2175 = smul.addr %s2174, 2
          %s2176 = smul.addr %s2175, 4
          %s2177 = scalar_lea.vmem %s7, %s2176
        $region64: #{tpu_custom_call.1} parent=55 // pred_fallthru
          _
      $region56: #{tpu_custom_call.1} parent=5 // pred_fallthru
        _
    $region6: #{tpu_custom_call.1} parent=1 // loop_footer
      %s21 = sadd.s32 1, %s17
    $region7: #{tpu_custom_call.1} parent=1 // loop_footer_branch
      %16 = sbr.rel target = $region3
    $region8: #{tpu_custom_call.1} parent=1 // loop_exit
      _
    %2178 = vsyncpa [#allocation3], 1
    %s2179 = scalar_lea.sflag [#allocation3], 1
    %2180 = vsyncpa %s2179, 1

</llo_original>
